<compile_context>
chip_gen: v5e
topology: v5e:2x2
jax: 0.10.0
libtpu: 0.0.40
codegen_flags: <defaults>
</compile_context>

<pallas_src>
import jax
import jax.numpy as jnp
from jax.experimental import pallas as pl
from jax.experimental.pallas import tpu as pltpu

H_RAW, H_PAD = 100, 128      # hidden width padded to the 128-lane boundary
OUT_RAW = 1                  # single network output (kept compact, no padding)


def mlp_kernel(x_ref, w1_ref, b1_ref, w2_ref, b2_ref, w3_ref, b3_ref,
               w4_ref, b4_ref, o_ref):
    """Full forward pass for one (tm, 2) batch tile; weights resident in VMEM."""
    x = x_ref[...]                        # (tm, 2)   f32
    w1 = w1_ref[...]                      # (2, 128)

    # Layer 1: K=2, so skip the MXU and do two broadcast multiply-adds on the VPU.
    h = x[:, 0:1] * w1[0:1, :] + x[:, 1:2] * w1[1:2, :] + b1_ref[...]
    h = jnp.tanh(h)                       # tanh lowers to the EUP slot

    # Layers 2-3: 128x128 MXU matmuls with f32 accumulation, tanh on the EUP.
    h = jnp.tanh(jnp.dot(h, w2_ref[...], preferred_element_type=jnp.float32)
                 + b2_ref[...])
    h = jnp.tanh(jnp.dot(h, w3_ref[...], preferred_element_type=jnp.float32)
                 + b3_ref[...])

    # Layer 4: single output neuron -> VPU multiply + XLU lane reduction instead
    # of a padded matmul; w4_ref is the (1, 128) zero-padded weight ROW.
    o = jnp.sum(h * w4_ref[...], axis=-1, keepdims=True) + b4_ref[...]   # (tm, 1)
    o_ref[...] = o.astype(o_ref.dtype)


def net_forward(x, padded_params, *, tm=512):
    """x: [N, 2] f32 -> [N, 1] f32 (same semantics as Net.forward).

    `padded_params` must come from pad_params(): fc1-fc3 weights stored [in, out]
    (pre-transposed vs. PyTorch) zero-padded to 128-wide, fc4 stored as a
    (1, 128) row plus a (1, 1) bias.
    """
    (w1, b1), (w2, b2), (w3, b3), (w4r, b4) = padded_params
    N, D_in = x.shape
    assert D_in == 2
    H = w1.shape[1]            # 128
    assert tm % 8 == 0

    # Tile balancing: make tiles nearly equal (v7x shards the "parallel" grid
    # axis over 2 TensorCores) and keep >= 2 grid steps when there is enough
    # work, instead of one full tile + one mostly-padded tile.
    n_tiles = pl.cdiv(N, tm)
    if n_tiles < 2 and N > 16:
        n_tiles = 2
    tm_eff = max(8, ((pl.cdiv(N, n_tiles) + 7) // 8) * 8)
    n_tiles = pl.cdiv(N, tm_eff)
    Np = n_tiles * tm_eff
    if Np != N:
        x = jnp.pad(x, ((0, Np - N), (0, 0)))   # padded rows sliced off below

    def rep_spec(shape):
        # Replicated weights/biases: constant index_map -> no re-DMA per step.
        return pl.BlockSpec(shape, lambda i: (0, 0))

    out = pl.pallas_call(
        mlp_kernel,
        out_shape=jax.ShapeDtypeStruct((Np, OUT_RAW), jnp.float32),
        grid_spec=pltpu.PrefetchScalarGridSpec(
            num_scalar_prefetch=0,
            grid=(n_tiles,),
            in_specs=[
                pl.BlockSpec((tm_eff, D_in), lambda i: (i, 0)),   # x tile
                rep_spec((D_in, H)), rep_spec((1, H)),            # fc1
                rep_spec((H, H)),    rep_spec((1, H)),            # fc2
                rep_spec((H, H)),    rep_spec((1, H)),            # fc3
                rep_spec((1, H)),    rep_spec((1, 1)),            # fc4 (row, scalar)
            ],
            out_specs=pl.BlockSpec((tm_eff, OUT_RAW), lambda i: (i, 0)),
        ),
        compiler_params=pltpu.CompilerParams(
            dimension_semantics=("parallel",)),
    )(x, w1, b1, w2, b2, w3, b3, w4r, b4)

    return out[:N]


def init_params(key):
    """Deterministic init mimicking nn.Linear default (uniform +/- 1/sqrt(fan_in)).
    Weights stored as [in, out] (transposed vs. PyTorch's [out, in]); unpadded."""
    dims = [(2, H_RAW), (H_RAW, H_RAW), (H_RAW, H_RAW), (H_RAW, OUT_RAW)]
    params = []
    for fan_in, fan_out in dims:
        key, kw, kb = jax.random.split(key, 3)
        bound = 1.0 / jnp.sqrt(fan_in)
        w = jax.random.uniform(kw, (fan_in, fan_out), jnp.float32, -bound, bound)
        b = jax.random.uniform(kb, (1, fan_out), jnp.float32, -bound, bound)
        params.append((w, b))
    return params


def pad_params(params):
    """Zero-pad to TPU-friendly shapes: hidden 100->128; fc4 stored as a row.

    Exact: padded hidden lanes see zero weights and zero bias, tanh(0)=0 flows
    through, and padded lanes of the fc4 row are zero, so the kernel output
    equals the unpadded network output (up to f32 summation-order rounding).
    """
    (w1, b1), (w2, b2), (w3, b3), (w4, b4) = params

    def pad_wb(w, b, fi_p, fo_p):
        fi, fo = w.shape
        wp = jnp.zeros((fi_p, fo_p), jnp.float32).at[:fi, :fo].set(w)
        bp = jnp.zeros((1, fo_p), jnp.float32).at[:, :fo].set(b)
        return wp, bp

    p1 = pad_wb(w1, b1, 2, H_PAD)
    p2 = pad_wb(w2, b2, H_PAD, H_PAD)
    p3 = pad_wb(w3, b3, H_PAD, H_PAD)
    # fc4: store the single output column as a zero-padded (1, 128) ROW so the
    # kernel can do a VPU multiply + lane reduction instead of a padded matmul.
    w4_row = jnp.zeros((1, H_PAD), jnp.float32).at[0, :H_RAW].set(w4[:, 0])
    b4_s = jnp.asarray(b4, jnp.float32).reshape(1, 1)
    return p1, p2, p3, (w4_row, b4_s)


def net_forward_ref(x, params):
    (w1, b1), (w2, b2), (w3, b3), (w4, b4) = params
    h = jnp.tanh(x @ w1 + b1)
    h = jnp.tanh(h @ w2 + b2)
    h = jnp.tanh(h @ w3 + b3)
    return h @ w4 + b4


if __name__ == "__main__":
    key = jax.random.PRNGKey(0)
    kx, kp = jax.random.split(key)
    # Small batch of (x, t) collocation points for the 2D inviscid Burgers PINN.
    # N=1000 is not a multiple of the tile (exercises the padding path) and
    # splits into two nearly-equal tiles (both v7x TensorCores active).
    # TODO(synk): real benchmarking should use N >= 32768 (xprof, min-of-runs).
    N = 1000
    x = jax.random.uniform(kx, (N, 2), jnp.float32)
    params = init_params(kp)          # unpadded (reference)
    padded = pad_params(params)       # padded / re-laid-out (kernel)

    out = net_forward(x, padded, tm=512)
    out = jax.block_until_ready(out)

    ref = net_forward_ref(x, params)
    assert out.shape == (N, OUT_RAW)
    assert jnp.allclose(out, ref, atol=1e-5, rtol=1e-5)
    print("KERNEL_OK")
</pallas_src>

<mosaic_0001>
module attributes {stable_mosaic.version = 11 : i64} {
  func.func @mlp_kernel(%arg0: i32, %arg1: memref<504x2xf32, #tpu.memory_space<vmem>>, %arg2: memref<2x128xf32, #tpu.memory_space<vmem>>, %arg3: memref<1x128xf32, #tpu.memory_space<vmem>>, %arg4: memref<128x128xf32, #tpu.memory_space<vmem>>, %arg5: memref<1x128xf32, #tpu.memory_space<vmem>>, %arg6: memref<128x128xf32, #tpu.memory_space<vmem>>, %arg7: memref<1x128xf32, #tpu.memory_space<vmem>>, %arg8: memref<1x128xf32, #tpu.memory_space<vmem>>, %arg9: memref<1x1xf32, #tpu.memory_space<vmem>>, %arg10: memref<504x1xf32, #tpu.memory_space<vmem>>) attributes {dimension_semantics = [#tpu.dimension_semantics<parallel>], iteration_bounds = array<i64: 2>, scalar_prefetch = 0 : i64, scratch_operands = 0 : i64, tpu.core_type = #tpu.core_type<tc>, window_params = [{transform_indices = @transform_0, window_bounds = array<i64: 504, 2>}, {pipeline_mode = #tpu.pipeline_mode<synchronous>, transform_indices = @transform_1, window_bounds = array<i64: 2, 128>}, {pipeline_mode = #tpu.pipeline_mode<synchronous>, transform_indices = @transform_2, window_bounds = array<i64: 1, 128>}, {pipeline_mode = #tpu.pipeline_mode<synchronous>, transform_indices = @transform_3, window_bounds = array<i64: 128, 128>}, {pipeline_mode = #tpu.pipeline_mode<synchronous>, transform_indices = @transform_4, window_bounds = array<i64: 1, 128>}, {pipeline_mode = #tpu.pipeline_mode<synchronous>, transform_indices = @transform_5, window_bounds = array<i64: 128, 128>}, {pipeline_mode = #tpu.pipeline_mode<synchronous>, transform_indices = @transform_6, window_bounds = array<i64: 1, 128>}, {pipeline_mode = #tpu.pipeline_mode<synchronous>, transform_indices = @transform_7, window_bounds = array<i64: 1, 128>}, {pipeline_mode = #tpu.pipeline_mode<synchronous>, transform_indices = @transform_8, window_bounds = array<i64: 1, 1>}, {transform_indices = @transform_9, window_bounds = array<i64: 504, 1>}]} {
    %c0 = arith.constant 0 : index
    %c0_0 = arith.constant 0 : index
    %0 = vector.load %arg1[%c0, %c0_0] : memref<504x2xf32, #tpu.memory_space<vmem>>, vector<504x2xf32>
    %c0_1 = arith.constant 0 : index
    %c0_2 = arith.constant 0 : index
    %1 = vector.load %arg2[%c0_1, %c0_2] : memref<2x128xf32, #tpu.memory_space<vmem>>, vector<2x128xf32>
    %2 = vector.extract_strided_slice %0 {offsets = [0, 0], sizes = [504, 1], strides = [1, 1]} : vector<504x2xf32> to vector<504x1xf32>
    %3 = vector.extract_strided_slice %1 {offsets = [0, 0], sizes = [1, 128], strides = [1, 1]} : vector<2x128xf32> to vector<1x128xf32>
    %4 = vector.broadcast %2 : vector<504x1xf32> to vector<504x128xf32>
    %5 = vector.broadcast %3 : vector<1x128xf32> to vector<504x128xf32>
    %6 = arith.mulf %4, %5 : vector<504x128xf32>
    %7 = vector.extract_strided_slice %0 {offsets = [0, 1], sizes = [504, 1], strides = [1, 1]} : vector<504x2xf32> to vector<504x1xf32>
    %8 = vector.extract_strided_slice %1 {offsets = [1, 0], sizes = [1, 128], strides = [1, 1]} : vector<2x128xf32> to vector<1x128xf32>
    %9 = vector.broadcast %7 : vector<504x1xf32> to vector<504x128xf32>
    %10 = vector.broadcast %8 : vector<1x128xf32> to vector<504x128xf32>
    %11 = arith.mulf %9, %10 : vector<504x128xf32>
    %12 = arith.addf %6, %11 : vector<504x128xf32>
    %c0_3 = arith.constant 0 : index
    %c0_4 = arith.constant 0 : index
    %13 = vector.load %arg3[%c0_3, %c0_4] : memref<1x128xf32, #tpu.memory_space<vmem>>, vector<1x128xf32>
    %14 = vector.broadcast %13 : vector<1x128xf32> to vector<504x128xf32>
    %15 = arith.addf %12, %14 : vector<504x128xf32>
    %16 = math.tanh %15 : vector<504x128xf32>
    %c0_5 = arith.constant 0 : index
    %c0_6 = arith.constant 0 : index
    %17 = vector.load %arg4[%c0_5, %c0_6] : memref<128x128xf32, #tpu.memory_space<vmem>>, vector<128x128xf32>
    %cst = arith.constant dense<0.000000e+00> : vector<504x128xf32>
    %18 = tpu.matmul %16, %17, %cst {dimension_numbers = #tpu.dot_dimension_numbers<[1], [0], [0], [1], [0, 0, 1, 1], [], []>} : vector<504x128xf32>, vector<128x128xf32>, vector<504x128xf32> -> vector<504x128xf32>
    %c0_7 = arith.constant 0 : index
    %c0_8 = arith.constant 0 : index
    %19 = vector.load %arg5[%c0_7, %c0_8] : memref<1x128xf32, #tpu.memory_space<vmem>>, vector<1x128xf32>
    %20 = vector.broadcast %19 : vector<1x128xf32> to vector<504x128xf32>
    %21 = arith.addf %18, %20 : vector<504x128xf32>
    %22 = math.tanh %21 : vector<504x128xf32>
    %c0_9 = arith.constant 0 : index
    %c0_10 = arith.constant 0 : index
    %23 = vector.load %arg6[%c0_9, %c0_10] : memref<128x128xf32, #tpu.memory_space<vmem>>, vector<128x128xf32>
    %cst_11 = arith.constant dense<0.000000e+00> : vector<504x128xf32>
    %24 = tpu.matmul %22, %23, %cst_11 {dimension_numbers = #tpu.dot_dimension_numbers<[1], [0], [0], [1], [0, 0, 1, 1], [], []>} : vector<504x128xf32>, vector<128x128xf32>, vector<504x128xf32> -> vector<504x128xf32>
    %c0_12 = arith.constant 0 : index
    %c0_13 = arith.constant 0 : index
    %25 = vector.load %arg7[%c0_12, %c0_13] : memref<1x128xf32, #tpu.memory_space<vmem>>, vector<1x128xf32>
    %26 = vector.broadcast %25 : vector<1x128xf32> to vector<504x128xf32>
    %27 = arith.addf %24, %26 : vector<504x128xf32>
    %28 = math.tanh %27 : vector<504x128xf32>
    %c0_14 = arith.constant 0 : index
    %c0_15 = arith.constant 0 : index
    %29 = vector.load %arg8[%c0_14, %c0_15] : memref<1x128xf32, #tpu.memory_space<vmem>>, vector<1x128xf32>
    %30 = vector.broadcast %29 : vector<1x128xf32> to vector<504x128xf32>
    %31 = arith.mulf %28, %30 : vector<504x128xf32>
    %cst_16 = arith.constant dense<0.000000e+00> : vector<504xf32>
    %32 = vector.multi_reduction <add>, %31, %cst_16 [1] : vector<504x128xf32> to vector<504xf32>
    %33 = vector.shape_cast %32 : vector<504xf32> to vector<504x1xf32>
    %c0_17 = arith.constant 0 : index
    %c0_18 = arith.constant 0 : index
    %34 = vector.load %arg9[%c0_17, %c0_18] : memref<1x1xf32, #tpu.memory_space<vmem>>, vector<1x1xf32>
    %35 = vector.broadcast %34 : vector<1x1xf32> to vector<504x1xf32>
    %36 = arith.addf %33, %35 : vector<504x1xf32>
    %c0_19 = arith.constant 0 : index
    %c0_20 = arith.constant 0 : index
    %37 = vector.load %arg10[%c0_19, %c0_20] : memref<504x1xf32, #tpu.memory_space<vmem>>, vector<504x1xf32>
    tpu.vector_store %arg10[%c0_19, %c0_20], %36 {strides = array<i32>} : memref<504x1xf32, #tpu.memory_space<vmem>>, vector<504x1xf32>,
    return
  }
  func.func @transform_0(%arg0: i32) -> (i32, i32) {
    %c0_i32 = arith.constant 0 : i32
    %c0_i32_0 = arith.constant 0 : i32
    return %arg0, %c0_i32 : i32, i32
  }
  func.func @transform_1(%arg0: i32) -> (i32, i32) {
    %c0_i32 = arith.constant 0 : i32
    %c0_i32_0 = arith.constant 0 : i32
    %c0_i32_1 = arith.constant 0 : i32
    return %c0_i32, %c0_i32_0 : i32, i32
  }
  func.func @transform_2(%arg0: i32) -> (i32, i32) {
    %c0_i32 = arith.constant 0 : i32
    %c0_i32_0 = arith.constant 0 : i32
    %c0_i32_1 = arith.constant 0 : i32
    return %c0_i32, %c0_i32_0 : i32, i32
  }
  func.func @transform_3(%arg0: i32) -> (i32, i32) {
    %c0_i32 = arith.constant 0 : i32
    %c0_i32_0 = arith.constant 0 : i32
    %c0_i32_1 = arith.constant 0 : i32
    return %c0_i32, %c0_i32_0 : i32, i32
  }
  func.func @transform_4(%arg0: i32) -> (i32, i32) {
    %c0_i32 = arith.constant 0 : i32
    %c0_i32_0 = arith.constant 0 : i32
    %c0_i32_1 = arith.constant 0 : i32
    return %c0_i32, %c0_i32_0 : i32, i32
  }
  func.func @transform_5(%arg0: i32) -> (i32, i32) {
    %c0_i32 = arith.constant 0 : i32
    %c0_i32_0 = arith.constant 0 : i32
    %c0_i32_1 = arith.constant 0 : i32
    return %c0_i32, %c0_i32_0 : i32, i32
  }
  func.func @transform_6(%arg0: i32) -> (i32, i32) {
    %c0_i32 = arith.constant 0 : i32
    %c0_i32_0 = arith.constant 0 : i32
    %c0_i32_1 = arith.constant 0 : i32
    return %c0_i32, %c0_i32_0 : i32, i32
  }
  func.func @transform_7(%arg0: i32) -> (i32, i32) {
    %c0_i32 = arith.constant 0 : i32
    %c0_i32_0 = arith.constant 0 : i32
    %c0_i32_1 = arith.constant 0 : i32
    return %c0_i32, %c0_i32_0 : i32, i32
  }
  func.func @transform_8(%arg0: i32) -> (i32, i32) {
    %c0_i32 = arith.constant 0 : i32
    %c0_i32_0 = arith.constant 0 : i32
    %c0_i32_1 = arith.constant 0 : i32
    return %c0_i32, %c0_i32_0 : i32, i32
  }
  func.func @transform_9(%arg0: i32) -> (i32, i32) {
    %c0_i32 = arith.constant 0 : i32
    %c0_i32_0 = arith.constant 0 : i32
    return %arg0, %c0_i32 : i32, i32
  }
}

</mosaic_0001>

<llo_original>
// kernel: tpu_custom_call.1
$region0: #{tpu_custom_call.1}
  #allocation0 [shape = 'u32[]', space=smem, size = 0x4, offset = 0x4, fixed_abs, tag = 'smem constant byte address 0x4 - core index']
  #allocation1 [shape = 'u32[72,128]{1,0:T(1,128)}', space=vmem, size = 0x9000, scoped, tag = 'internal scratch']
  #allocation2 [shape = 'f32[1,1]{1,0:T(1,128)S(1)}', space=vmem, size = 0x200, scoped, tag = 'scoped memory for tpu_custom_call.1']
  %s0 = inlined_call_operand.vmem [shape: f32[1008,2], index: 0, kind: input, shape index: {}]
  %s1 = inlined_call_operand.vmem [shape: f32[2,128], index: 1, kind: input, shape index: {}]
  %s2 = inlined_call_operand.vmem [shape: f32[1,128], index: 2, kind: input, shape index: {}]
  %s3 = inlined_call_operand.vmem [shape: f32[128,128], index: 3, kind: input, shape index: {}]
  %s4 = inlined_call_operand.vmem [shape: f32[1,128], index: 4, kind: input, shape index: {}]
  %s5 = inlined_call_operand.vmem [shape: f32[128,128], index: 5, kind: input, shape index: {}]
  %s6 = inlined_call_operand.vmem [shape: f32[1,128], index: 6, kind: input, shape index: {}]
  %s7 = inlined_call_operand.vmem [shape: f32[1,128], index: 7, kind: input, shape index: {}]
  %s8 = inlined_call_operand.<no memory space> [shape: f32[1,1], index: 8, kind: input, shape index: {}]
  %s9 = inlined_call_operand.vmem [shape: f32[1008,1], index: 9, kind: output, shape index: {}]
  %s10 = sld [smem:[#allocation0]]
  $region69: #{tpu_custom_call.1} parent=0
    _
  %s12 = ssub.s32 1, %s10
  %s13 = scalar_select 0, %s12, %s10
  %v14 = vstv %s8
  %15 = vst [vmem:[#allocation2] sm:$0x1] %v14
  loop: start=0, step=1, limit=4
  $region2: #{tpu_custom_call.1} parent=0 // loop_pre_header
    _
  $region3: #{tpu_custom_call.1} parent=0 // loop_header
    %s17 = sphi 0, %s21
    %p18 = scmp.ge.s32.totalorder %s17, 4
    %s27 = sphi 0, %s29
    %s30 = sphi 0, %s27
    %s31 = sphi 0, %s30
    %s47 = sphi 0, %s31
    %s51 = sphi 0, %s51
    %s53 = sphi 0, %s51
    %s54 = sphi 0, %s53
    %s68 = sphi 0, %s54
    %s72 = sphi 0, %s72
    %s74 = sphi 0, %s72
    %s75 = sphi 0, %s74
    %s89 = sphi 0, %s75
    %s93 = sphi 0, %s93
    %s95 = sphi 0, %s93
    %s96 = sphi 0, %s95
    %s110 = sphi 0, %s96
    %s114 = sphi 0, %s114
    %s116 = sphi 0, %s114
    %s117 = sphi 0, %s116
    %s131 = sphi 0, %s117
    %s135 = sphi 0, %s135
    %s137 = sphi 0, %s135
    %s138 = sphi 0, %s137
    %s152 = sphi 0, %s138
    %s156 = sphi 0, %s156
    %s158 = sphi 0, %s156
    %s159 = sphi 0, %s158
    %s173 = sphi 0, %s159
    %s177 = sphi 0, %s177
    %s179 = sphi 0, %s177
    %s180 = sphi 0, %s179
    %s194 = sphi 0, %s180
    %s198 = sphi 0, %s198
    %s200 = sphi 0, %s198
    %s201 = sphi 0, %s200
    %s215 = sphi 0, %s201
    %s221 = sphi 0, %s223
    %s224 = sphi 0, %s221
    %s225 = sphi 0, %s224
    %s241 = sphi 0, %s225
  $region4: #{tpu_custom_call.1} parent=0 // loop_header_branch
    %20 = sbr.rel (%p18) target = $region8
  $region5: #{tpu_custom_call.1} parent=0 // loop_body
    %s22 = ssub.s32 %s17, 1
    %s23 = ssub.s32 %s17, 2
    %s24 = sadd.s32 %s17, 1
    %s25 = ssub.s32 %s17, %s24
    %p26 = scmp.eq.s32.totalorder %s25, 0
    %s28 = sadd.s32 %s27, 1
    %s29 = scalar_select %p26, %s27, %s28
    %p32 = pneg %p26
    %p33 = scmp.eq.s32.totalorder %s17, 1
    %p34 = por %p32, %p33
    %p35 = scmp.ne.s32.totalorder %s27, %s30
    %p36 = scmp.eq.s32.totalorder %s17, 0
    %p37 = por %p35, %p36
    %p38 = scmp.ne.s32.totalorder %s27, %s30
    %p39 = scmp.eq.s32.totalorder %s22, 1
    %p40 = por %p38, %p39
    %p41 = scmp.ne.s32.totalorder %s30, %s31
    %p42 = scmp.eq.s32.totalorder %s22, 0
    %p43 = por %p41, %p42
    %p44 = scmp.ne.s32.totalorder %s30, %s31
    %p45 = scmp.eq.s32.totalorder %s23, 1
    %p46 = por %p44, %p45
    %p48 = scmp.ne.s32.totalorder %s31, %s47
    %p49 = scmp.eq.s32.totalorder %s23, 0
    %p50 = por %p48, %p49
    %s52 = sadd.s32 %s51, 1
    %p55 = scmp.eq.s32.totalorder %s17, 1
    %p56 = scmp.ne.s32.totalorder %s51, %s53
    %p57 = scmp.eq.s32.totalorder %s17, 0
    %p58 = por %p56, %p57
    %p59 = scmp.ne.s32.totalorder %s51, %s53
    %p60 = scmp.eq.s32.totalorder %s22, 1
    %p61 = por %p59, %p60
    %p62 = scmp.ne.s32.totalorder %s53, %s54
    %p63 = scmp.eq.s32.totalorder %s22, 0
    %p64 = por %p62, %p63
    %p65 = scmp.ne.s32.totalorder %s53, %s54
    %p66 = scmp.eq.s32.totalorder %s23, 1
    %p67 = por %p65, %p66
    %p69 = scmp.ne.s32.totalorder %s54, %s68
    %p70 = scmp.eq.s32.totalorder %s23, 0
    %p71 = por %p69, %p70
    %s73 = sadd.s32 %s72, 1
    %p76 = scmp.eq.s32.totalorder %s17, 1
    %p77 = scmp.ne.s32.totalorder %s72, %s74
    %p78 = scmp.eq.s32.totalorder %s17, 0
    %p79 = por %p77, %p78
    %p80 = scmp.ne.s32.totalorder %s72, %s74
    %p81 = scmp.eq.s32.totalorder %s22, 1
    %p82 = por %p80, %p81
    %p83 = scmp.ne.s32.totalorder %s74, %s75
    %p84 = scmp.eq.s32.totalorder %s22, 0
    %p85 = por %p83, %p84
    %p86 = scmp.ne.s32.totalorder %s74, %s75
    %p87 = scmp.eq.s32.totalorder %s23, 1
    %p88 = por %p86, %p87
    %p90 = scmp.ne.s32.totalorder %s75, %s89
    %p91 = scmp.eq.s32.totalorder %s23, 0
    %p92 = por %p90, %p91
    %s94 = sadd.s32 %s93, 1
    %p97 = scmp.eq.s32.totalorder %s17, 1
    %p98 = scmp.ne.s32.totalorder %s93, %s95
    %p99 = scmp.eq.s32.totalorder %s17, 0
    %p100 = por %p98, %p99
    %p101 = scmp.ne.s32.totalorder %s93, %s95
    %p102 = scmp.eq.s32.totalorder %s22, 1
    %p103 = por %p101, %p102
    %p104 = scmp.ne.s32.totalorder %s95, %s96
    %p105 = scmp.eq.s32.totalorder %s22, 0
    %p106 = por %p104, %p105
    %p107 = scmp.ne.s32.totalorder %s95, %s96
    %p108 = scmp.eq.s32.totalorder %s23, 1
    %p109 = por %p107, %p108
    %p111 = scmp.ne.s32.totalorder %s96, %s110
    %p112 = scmp.eq.s32.totalorder %s23, 0
    %p113 = por %p111, %p112
    %s115 = sadd.s32 %s114, 1
    %p118 = scmp.eq.s32.totalorder %s17, 1
    %p119 = scmp.ne.s32.totalorder %s114, %s116
    %p120 = scmp.eq.s32.totalorder %s17, 0
    %p121 = por %p119, %p120
    %p122 = scmp.ne.s32.totalorder %s114, %s116
    %p123 = scmp.eq.s32.totalorder %s22, 1
    %p124 = por %p122, %p123
    %p125 = scmp.ne.s32.totalorder %s116, %s117
    %p126 = scmp.eq.s32.totalorder %s22, 0
    %p127 = por %p125, %p126
    %p128 = scmp.ne.s32.totalorder %s116, %s117
    %p129 = scmp.eq.s32.totalorder %s23, 1
    %p130 = por %p128, %p129
    %p132 = scmp.ne.s32.totalorder %s117, %s131
    %p133 = scmp.eq.s32.totalorder %s23, 0
    %p134 = por %p132, %p133
    %s136 = sadd.s32 %s135, 1
    %p139 = scmp.eq.s32.totalorder %s17, 1
    %p140 = scmp.ne.s32.totalorder %s135, %s137
    %p141 = scmp.eq.s32.totalorder %s17, 0
    %p142 = por %p140, %p141
    %p143 = scmp.ne.s32.totalorder %s135, %s137
    %p144 = scmp.eq.s32.totalorder %s22, 1
    %p145 = por %p143, %p144
    %p146 = scmp.ne.s32.totalorder %s137, %s138
    %p147 = scmp.eq.s32.totalorder %s22, 0
    %p148 = por %p146, %p147
    %p149 = scmp.ne.s32.totalorder %s137, %s138
    %p150 = scmp.eq.s32.totalorder %s23, 1
    %p151 = por %p149, %p150
    %p153 = scmp.ne.s32.totalorder %s138, %s152
    %p154 = scmp.eq.s32.totalorder %s23, 0
    %p155 = por %p153, %p154
    %s157 = sadd.s32 %s156, 1
    %p160 = scmp.eq.s32.totalorder %s17, 1
    %p161 = scmp.ne.s32.totalorder %s156, %s158
    %p162 = scmp.eq.s32.totalorder %s17, 0
    %p163 = por %p161, %p162
    %p164 = scmp.ne.s32.totalorder %s156, %s158
    %p165 = scmp.eq.s32.totalorder %s22, 1
    %p166 = por %p164, %p165
    %p167 = scmp.ne.s32.totalorder %s158, %s159
    %p168 = scmp.eq.s32.totalorder %s22, 0
    %p169 = por %p167, %p168
    %p170 = scmp.ne.s32.totalorder %s158, %s159
    %p171 = scmp.eq.s32.totalorder %s23, 1
    %p172 = por %p170, %p171
    %p174 = scmp.ne.s32.totalorder %s159, %s173
    %p175 = scmp.eq.s32.totalorder %s23, 0
    %p176 = por %p174, %p175
    %s178 = sadd.s32 %s177, 1
    %p181 = scmp.eq.s32.totalorder %s17, 1
    %p182 = scmp.ne.s32.totalorder %s177, %s179
    %p183 = scmp.eq.s32.totalorder %s17, 0
    %p184 = por %p182, %p183
    %p185 = scmp.ne.s32.totalorder %s177, %s179
    %p186 = scmp.eq.s32.totalorder %s22, 1
    %p187 = por %p185, %p186
    %p188 = scmp.ne.s32.totalorder %s179, %s180
    %p189 = scmp.eq.s32.totalorder %s22, 0
    %p190 = por %p188, %p189
    %p191 = scmp.ne.s32.totalorder %s179, %s180
    %p192 = scmp.eq.s32.totalorder %s23, 1
    %p193 = por %p191, %p192
    %p195 = scmp.ne.s32.totalorder %s180, %s194
    %p196 = scmp.eq.s32.totalorder %s23, 0
    %p197 = por %p195, %p196
    %s199 = sadd.s32 %s198, 1
    %p202 = scmp.eq.s32.totalorder %s17, 1
    %p203 = scmp.ne.s32.totalorder %s198, %s200
    %p204 = scmp.eq.s32.totalorder %s17, 0
    %p205 = por %p203, %p204
    %p206 = scmp.ne.s32.totalorder %s198, %s200
    %p207 = scmp.eq.s32.totalorder %s22, 1
    %p208 = por %p206, %p207
    %p209 = scmp.ne.s32.totalorder %s200, %s201
    %p210 = scmp.eq.s32.totalorder %s22, 0
    %p211 = por %p209, %p210
    %p212 = scmp.ne.s32.totalorder %s200, %s201
    %p213 = scmp.eq.s32.totalorder %s23, 1
    %p214 = por %p212, %p213
    %p216 = scmp.ne.s32.totalorder %s201, %s215
    %p217 = scmp.eq.s32.totalorder %s23, 0
    %p218 = por %p216, %p217
    %s219 = ssub.s32 %s17, %s24
    %p220 = scmp.eq.s32.totalorder %s219, 0
    %s222 = sadd.s32 %s221, 1
    %s223 = scalar_select %p220, %s221, %s222
    %p226 = pneg %p220
    %p227 = scmp.eq.s32.totalorder %s17, 1
    %p228 = por %p226, %p227
    %p229 = scmp.ne.s32.totalorder %s221, %s224
    %p230 = scmp.eq.s32.totalorder %s17, 0
    %p231 = por %p229, %p230
    %p232 = scmp.ne.s32.totalorder %s221, %s224
    %p233 = scmp.eq.s32.totalorder %s22, 1
    %p234 = por %p232, %p233
    %p235 = scmp.ne.s32.totalorder %s224, %s225
    %p236 = scmp.eq.s32.totalorder %s22, 0
    %p237 = por %p235, %p236
    %p238 = scmp.ne.s32.totalorder %s224, %s225
    %p239 = scmp.eq.s32.totalorder %s23, 1
    %p240 = por %p238, %p239
    %p242 = scmp.ne.s32.totalorder %s225, %s241
    %p243 = scmp.eq.s32.totalorder %s23, 0
    %p244 = por %p242, %p243
    %p245 = scmp.le.s32.totalorder 1, %s17
    %p246 = scmp.lt.s32.totalorder %s17, 3
    %p247 = pnand %p245, %p246
    %p248 = pneg %p247
    // Predicated region
    $region9: #{tpu_custom_call.1} parent=5 // pred_check
      _
    $region10: #{tpu_custom_call.1} parent=5 // pred_check_branch
      %250 = sbr.rel (%p247) target = $region12
    $region11: #{tpu_custom_call.1} parent=5 // pred_region
      %s251 = ssub.s32 %s17, 1
      // Predicated region
      $region13: #{tpu_custom_call.1} parent=11 // pred_check
        %p252 = pneg %p64
      $region14: #{tpu_custom_call.1} parent=11 // pred_check_branch
        %254 = sbr.rel (%p252) target = $region16
      $region15: #{tpu_custom_call.1} parent=11 // pred_region
        _
      $region16: #{tpu_custom_call.1} parent=11 // pred_fallthru
        _
      // Predicated region
      $region17: #{tpu_custom_call.1} parent=11 // pred_check
        %p255 = pneg %p85
      $region18: #{tpu_custom_call.1} parent=11 // pred_check_branch
        %257 = sbr.rel (%p255) target = $region20
      $region19: #{tpu_custom_call.1} parent=11 // pred_region
        _
      $region20: #{tpu_custom_call.1} parent=11 // pred_fallthru
        _
      // Predicated region
      $region21: #{tpu_custom_call.1} parent=11 // pred_check
        %p258 = pneg %p106
      $region22: #{tpu_custom_call.1} parent=11 // pred_check_branch
        %260 = sbr.rel (%p258) target = $region24
      $region23: #{tpu_custom_call.1} parent=11 // pred_region
        _
      $region24: #{tpu_custom_call.1} parent=11 // pred_fallthru
        _
      // Predicated region
      $region25: #{tpu_custom_call.1} parent=11 // pred_check
        %p261 = pneg %p127
      $region26: #{tpu_custom_call.1} parent=11 // pred_check_branch
        %263 = sbr.rel (%p261) target = $region28
      $region27: #{tpu_custom_call.1} parent=11 // pred_region
        _
      $region28: #{tpu_custom_call.1} parent=11 // pred_fallthru
        _
      // Predicated region
      $region29: #{tpu_custom_call.1} parent=11 // pred_check
        %p264 = pneg %p148
      $region30: #{tpu_custom_call.1} parent=11 // pred_check_branch
        %266 = sbr.rel (%p264) target = $region32
      $region31: #{tpu_custom_call.1} parent=11 // pred_region
        _
      $region32: #{tpu_custom_call.1} parent=11 // pred_fallthru
        _
      // Predicated region
      $region33: #{tpu_custom_call.1} parent=11 // pred_check
        %p267 = pneg %p169
      $region34: #{tpu_custom_call.1} parent=11 // pred_check_branch
        %269 = sbr.rel (%p267) target = $region36
      $region35: #{tpu_custom_call.1} parent=11 // pred_region
        _
      $region36: #{tpu_custom_call.1} parent=11 // pred_fallthru
        _
      // Predicated region
      $region37: #{tpu_custom_call.1} parent=11 // pred_check
        %p270 = pneg %p190
      $region38: #{tpu_custom_call.1} parent=11 // pred_check_branch
        %272 = sbr.rel (%p270) target = $region40
      $region39: #{tpu_custom_call.1} parent=11 // pred_region
        _
      $region40: #{tpu_custom_call.1} parent=11 // pred_fallthru
        _
      // Predicated region
      $region41: #{tpu_custom_call.1} parent=11 // pred_check
        %p273 = pneg %p211
      $region42: #{tpu_custom_call.1} parent=11 // pred_check_branch
        %275 = sbr.rel (%p273) target = $region44
      $region43: #{tpu_custom_call.1} parent=11 // pred_region
        _
      $region44: #{tpu_custom_call.1} parent=11 // pred_fallthru
        _
    $region12: #{tpu_custom_call.1} parent=5 // pred_fallthru
      _
    %p276 = scmp.lt.s32.totalorder %s17, 2
    // Predicated region
    $region45: #{tpu_custom_call.1} parent=5 // pred_check
      %p277 = pneg %p276
    $region46: #{tpu_custom_call.1} parent=5 // pred_check_branch
      %279 = sbr.rel (%p277) target = $region48
    $region47: #{tpu_custom_call.1} parent=5 // pred_region
      // Predicated region
      $region49: #{tpu_custom_call.1} parent=47 // pred_check
        %p280 = pneg %p37
      $region50: #{tpu_custom_call.1} parent=47 // pred_check_branch
        %282 = sbr.rel (%p280) target = $region52
      $region51: #{tpu_custom_call.1} parent=47 // pred_region
        %s283 = smul.u32 63, %s17
        %p284 = scmp.lt.s32.totalorder %s283, 125
        %s285 = scalar_select %p284, %s283, 125
        %s286 = smul.addr %s285, 8
        %s287 = scalar_lea.vmem %s0, %s286
        %s288 = smul.u32 63, %s17
      $region52: #{tpu_custom_call.1} parent=47 // pred_fallthru
        _
    $region48: #{tpu_custom_call.1} parent=5 // pred_fallthru
      _
    %p289 = scmp.le.s32.totalorder 1, %s17
    %p290 = scmp.lt.s32.totalorder %s17, 3
    %p291 = pnand %p289, %p290
    %p292 = pneg %p291
    // Predicated region
    $region53: #{tpu_custom_call.1} parent=5 // pred_check
      _
    $region54: #{tpu_custom_call.1} parent=5 // pred_check_branch
      %294 = sbr.rel (%p291) target = $region56
    $region55: #{tpu_custom_call.1} parent=5 // pred_region
      %s295 = ssub.s32 %s17, 1
      %s296 = smul.u32 63, %s22
      %p297 = scmp.lt.s32.totalorder %s296, 125
      %s298 = scalar_select %p297, %s296, 125
      %s299 = smul.addr %s298, 8
      %s300 = scalar_lea.vmem %s0, %s299
      %p301 = pneg %p43
      %p302 = pneg %p40
      %p303 = pneg %p64
      %p304 = pneg %p61
      %p305 = pneg %p85
      %p306 = pneg %p82
      %p307 = pneg %p106
      %p308 = pneg %p103
      %p309 = pneg %p127
      %p310 = pneg %p124
      %p311 = pneg %p148
      %p312 = pneg %p145
      %p313 = pneg %p169
      %p314 = pneg %p166
      %p315 = pneg %p190
      %p316 = pneg %p187
      %p317 = pneg %p211
      %p318 = pneg %p208
      %p319 = pneg %p237
      %p320 = pneg %p234
      %s321 = smul.u32 63, %s22
      %p322 = scmp.lt.s32.totalorder %s321, 125
      %s323 = scalar_select %p322, %s321, 125
      %s324 = smul.addr %s323, 8
      %s325 = scalar_lea.vmem %s9, %s324
      %s326 = smul.u32 63, %s22
      %p327 = scmp.lt.s32.totalorder %s326, 125
      %s328 = scalar_select %p327, %s326, 125
      %s329 = smul.addr %s328, 8
      %s330 = scalar_lea.vmem %s0, %s329
      %s331 = smul.u32 63, %s22
      %s332 = smul.u32 63, %s22
      %p333 = scmp.lt.s32.totalorder %s332, 125
      %s334 = scalar_select %p333, %s332, 125
      %s335 = smul.addr %s334, 8
      %s336 = scalar_lea.vmem %s9, %s335
      %s337 = smul.u32 63, %s22
      %v338 = vld [vmem:[%s330] sm:$0xff]
      %v339 = vld [vmem:[%s330 + $0x8] sm:$0xff]
      %v340 = vld [vmem:[%s330 + $0x10] sm:$0xff]
      %v341 = vld [vmem:[%s330 + $0x18] sm:$0xff]
      %v342 = vld [vmem:[%s330 + $0x20] sm:$0xff]
      %v343 = vld [vmem:[%s330 + $0x28] sm:$0xff]
      %v344 = vld [vmem:[%s330 + $0x30] sm:$0xff]
      %v345 = vld [vmem:[%s330 + $0x38] sm:$0xff]
      %v346 = vld [vmem:[%s330 + $0x40] sm:$0xff]
      %v347 = vld [vmem:[%s330 + $0x48] sm:$0xff]
      %v348 = vld [vmem:[%s330 + $0x50] sm:$0xff]
      %v349 = vld [vmem:[%s330 + $0x58] sm:$0xff]
      %v350 = vld [vmem:[%s330 + $0x60] sm:$0xff]
      %v351 = vld [vmem:[%s330 + $0x68] sm:$0xff]
      %v352 = vld [vmem:[%s330 + $0x70] sm:$0xff]
      %v353 = vld [vmem:[%s330 + $0x78] sm:$0xff]
      %v354 = vld [vmem:[%s330 + $0x80] sm:$0xff]
      %v355 = vld [vmem:[%s330 + $0x88] sm:$0xff]
      %v356 = vld [vmem:[%s330 + $0x90] sm:$0xff]
      %v357 = vld [vmem:[%s330 + $0x98] sm:$0xff]
      %v358 = vld [vmem:[%s330 + $0xa0] sm:$0xff]
      %v359 = vld [vmem:[%s330 + $0xa8] sm:$0xff]
      %v360 = vld [vmem:[%s330 + $0xb0] sm:$0xff]
      %v361 = vld [vmem:[%s330 + $0xb8] sm:$0xff]
      %v362 = vld [vmem:[%s330 + $0xc0] sm:$0xff]
      %v363 = vld [vmem:[%s330 + $0xc8] sm:$0xff]
      %v364 = vld [vmem:[%s330 + $0xd0] sm:$0xff]
      %v365 = vld [vmem:[%s330 + $0xd8] sm:$0xff]
      %v366 = vld [vmem:[%s330 + $0xe0] sm:$0xff]
      %v367 = vld [vmem:[%s330 + $0xe8] sm:$0xff]
      %v368 = vld [vmem:[%s330 + $0xf0] sm:$0xff]
      %v369 = vld [vmem:[%s330 + $0xf8] sm:$0xff]
      %v370 = vld [vmem:[%s330 + $0x100] sm:$0xff]
      %v371 = vld [vmem:[%s330 + $0x108] sm:$0xff]
      %v372 = vld [vmem:[%s330 + $0x110] sm:$0xff]
      %v373 = vld [vmem:[%s330 + $0x118] sm:$0xff]
      %v374 = vld [vmem:[%s330 + $0x120] sm:$0xff]
      %v375 = vld [vmem:[%s330 + $0x128] sm:$0xff]
      %v376 = vld [vmem:[%s330 + $0x130] sm:$0xff]
      %v377 = vld [vmem:[%s330 + $0x138] sm:$0xff]
      %v378 = vld [vmem:[%s330 + $0x140] sm:$0xff]
      %v379 = vld [vmem:[%s330 + $0x148] sm:$0xff]
      %v380 = vld [vmem:[%s330 + $0x150] sm:$0xff]
      %v381 = vld [vmem:[%s330 + $0x158] sm:$0xff]
      %v382 = vld [vmem:[%s330 + $0x160] sm:$0xff]
      %v383 = vld [vmem:[%s330 + $0x168] sm:$0xff]
      %v384 = vld [vmem:[%s330 + $0x170] sm:$0xff]
      %v385 = vld [vmem:[%s330 + $0x178] sm:$0xff]
      %v386 = vld [vmem:[%s330 + $0x180] sm:$0xff]
      %v387 = vld [vmem:[%s330 + $0x188] sm:$0xff]
      %v388 = vld [vmem:[%s330 + $0x190] sm:$0xff]
      %v389 = vld [vmem:[%s330 + $0x198] sm:$0xff]
      %v390 = vld [vmem:[%s330 + $0x1a0] sm:$0xff]
      %v391 = vld [vmem:[%s330 + $0x1a8] sm:$0xff]
      %v392 = vld [vmem:[%s330 + $0x1b0] sm:$0xff]
      %v393 = vld [vmem:[%s330 + $0x1b8] sm:$0xff]
      %v394 = vld [vmem:[%s330 + $0x1c0] sm:$0xff]
      %v395 = vld [vmem:[%s330 + $0x1c8] sm:$0xff]
      %v396 = vld [vmem:[%s330 + $0x1d0] sm:$0xff]
      %v397 = vld [vmem:[%s330 + $0x1d8] sm:$0xff]
      %v398 = vld [vmem:[%s330 + $0x1e0] sm:$0xff]
      %v399 = vld [vmem:[%s330 + $0x1e8] sm:$0xff]
      %v400 = vld [vmem:[%s330 + $0x1f0] sm:$0xff]
      %v401 = vld [vmem:[%s1] sm:$0x3]
      %403 = vset.pattern.permute.xlu0 0
      %404 = vperm.xlu0 %403, %v338
      %v405 = vpop.permute.xlu0 %404
      %408 = vset.pattern.permute.xlu0 0
      %409 = vperm.xlu0 %408, %v339
      %v410 = vpop.permute.xlu0 %409
      %413 = vset.pattern.permute.xlu0 0
      %414 = vperm.xlu0 %413, %v340
      %v415 = vpop.permute.xlu0 %414
      %418 = vset.pattern.permute.xlu0 0
      %419 = vperm.xlu0 %418, %v341
      %v420 = vpop.permute.xlu0 %419
      %423 = vset.pattern.permute.xlu0 0
      %424 = vperm.xlu0 %423, %v342
      %v425 = vpop.permute.xlu0 %424
      %428 = vset.pattern.permute.xlu0 0
      %429 = vperm.xlu0 %428, %v343
      %v430 = vpop.permute.xlu0 %429
      %433 = vset.pattern.permute.xlu0 0
      %434 = vperm.xlu0 %433, %v344
      %v435 = vpop.permute.xlu0 %434
      %438 = vset.pattern.permute.xlu0 0
      %439 = vperm.xlu0 %438, %v345
      %v440 = vpop.permute.xlu0 %439
      %443 = vset.pattern.permute.xlu0 0
      %444 = vperm.xlu0 %443, %v346
      %v445 = vpop.permute.xlu0 %444
      %448 = vset.pattern.permute.xlu0 0
      %449 = vperm.xlu0 %448, %v347
      %v450 = vpop.permute.xlu0 %449
      %453 = vset.pattern.permute.xlu0 0
      %454 = vperm.xlu0 %453, %v348
      %v455 = vpop.permute.xlu0 %454
      %458 = vset.pattern.permute.xlu0 0
      %459 = vperm.xlu0 %458, %v349
      %v460 = vpop.permute.xlu0 %459
      %463 = vset.pattern.permute.xlu0 0
      %464 = vperm.xlu0 %463, %v350
      %v465 = vpop.permute.xlu0 %464
      %468 = vset.pattern.permute.xlu0 0
      %469 = vperm.xlu0 %468, %v351
      %v470 = vpop.permute.xlu0 %469
      %473 = vset.pattern.permute.xlu0 0
      %474 = vperm.xlu0 %473, %v352
      %v475 = vpop.permute.xlu0 %474
      %478 = vset.pattern.permute.xlu0 0
      %479 = vperm.xlu0 %478, %v353
      %v480 = vpop.permute.xlu0 %479
      %483 = vset.pattern.permute.xlu0 0
      %484 = vperm.xlu0 %483, %v354
      %v485 = vpop.permute.xlu0 %484
      %488 = vset.pattern.permute.xlu0 0
      %489 = vperm.xlu0 %488, %v355
      %v490 = vpop.permute.xlu0 %489
      %493 = vset.pattern.permute.xlu0 0
      %494 = vperm.xlu0 %493, %v356
      %v495 = vpop.permute.xlu0 %494
      %498 = vset.pattern.permute.xlu0 0
      %499 = vperm.xlu0 %498, %v357
      %v500 = vpop.permute.xlu0 %499
      %503 = vset.pattern.permute.xlu0 0
      %504 = vperm.xlu0 %503, %v358
      %v505 = vpop.permute.xlu0 %504
      %508 = vset.pattern.permute.xlu0 0
      %509 = vperm.xlu0 %508, %v359
      %v510 = vpop.permute.xlu0 %509
      %513 = vset.pattern.permute.xlu0 0
      %514 = vperm.xlu0 %513, %v360
      %v515 = vpop.permute.xlu0 %514
      %518 = vset.pattern.permute.xlu0 0
      %519 = vperm.xlu0 %518, %v361
      %v520 = vpop.permute.xlu0 %519
      %523 = vset.pattern.permute.xlu0 0
      %524 = vperm.xlu0 %523, %v362
      %v525 = vpop.permute.xlu0 %524
      %528 = vset.pattern.permute.xlu0 0
      %529 = vperm.xlu0 %528, %v363
      %v530 = vpop.permute.xlu0 %529
      %533 = vset.pattern.permute.xlu0 0
      %534 = vperm.xlu0 %533, %v364
      %v535 = vpop.permute.xlu0 %534
      %538 = vset.pattern.permute.xlu0 0
      %539 = vperm.xlu0 %538, %v365
      %v540 = vpop.permute.xlu0 %539
      %543 = vset.pattern.permute.xlu0 0
      %544 = vperm.xlu0 %543, %v366
      %v545 = vpop.permute.xlu0 %544
      %548 = vset.pattern.permute.xlu0 0
      %549 = vperm.xlu0 %548, %v367
      %v550 = vpop.permute.xlu0 %549
      %553 = vset.pattern.permute.xlu0 0
      %554 = vperm.xlu0 %553, %v368
      %v555 = vpop.permute.xlu0 %554
      %558 = vset.pattern.permute.xlu0 0
      %559 = vperm.xlu0 %558, %v369
      %v560 = vpop.permute.xlu0 %559
      %563 = vset.pattern.permute.xlu0 0
      %564 = vperm.xlu0 %563, %v370
      %v565 = vpop.permute.xlu0 %564
      %568 = vset.pattern.permute.xlu0 0
      %569 = vperm.xlu0 %568, %v371
      %v570 = vpop.permute.xlu0 %569
      %573 = vset.pattern.permute.xlu0 0
      %574 = vperm.xlu0 %573, %v372
      %v575 = vpop.permute.xlu0 %574
      %578 = vset.pattern.permute.xlu0 0
      %579 = vperm.xlu0 %578, %v373
      %v580 = vpop.permute.xlu0 %579
      %583 = vset.pattern.permute.xlu0 0
      %584 = vperm.xlu0 %583, %v374
      %v585 = vpop.permute.xlu0 %584
      %588 = vset.pattern.permute.xlu0 0
      %589 = vperm.xlu0 %588, %v375
      %v590 = vpop.permute.xlu0 %589
      %593 = vset.pattern.permute.xlu0 0
      %594 = vperm.xlu0 %593, %v376
      %v595 = vpop.permute.xlu0 %594
      %598 = vset.pattern.permute.xlu0 0
      %599 = vperm.xlu0 %598, %v377
      %v600 = vpop.permute.xlu0 %599
      %603 = vset.pattern.permute.xlu0 0
      %604 = vperm.xlu0 %603, %v378
      %v605 = vpop.permute.xlu0 %604
      %608 = vset.pattern.permute.xlu0 0
      %609 = vperm.xlu0 %608, %v379
      %v610 = vpop.permute.xlu0 %609
      %613 = vset.pattern.permute.xlu0 0
      %614 = vperm.xlu0 %613, %v380
      %v615 = vpop.permute.xlu0 %614
      %618 = vset.pattern.permute.xlu0 0
      %619 = vperm.xlu0 %618, %v381
      %v620 = vpop.permute.xlu0 %619
      %623 = vset.pattern.permute.xlu0 0
      %624 = vperm.xlu0 %623, %v382
      %v625 = vpop.permute.xlu0 %624
      %628 = vset.pattern.permute.xlu0 0
      %629 = vperm.xlu0 %628, %v383
      %v630 = vpop.permute.xlu0 %629
      %633 = vset.pattern.permute.xlu0 0
      %634 = vperm.xlu0 %633, %v384
      %v635 = vpop.permute.xlu0 %634
      %638 = vset.pattern.permute.xlu0 0
      %639 = vperm.xlu0 %638, %v385
      %v640 = vpop.permute.xlu0 %639
      %643 = vset.pattern.permute.xlu0 0
      %644 = vperm.xlu0 %643, %v386
      %v645 = vpop.permute.xlu0 %644
      %648 = vset.pattern.permute.xlu0 0
      %649 = vperm.xlu0 %648, %v387
      %v650 = vpop.permute.xlu0 %649
      %653 = vset.pattern.permute.xlu0 0
      %654 = vperm.xlu0 %653, %v388
      %v655 = vpop.permute.xlu0 %654
      %658 = vset.pattern.permute.xlu0 0
      %659 = vperm.xlu0 %658, %v389
      %v660 = vpop.permute.xlu0 %659
      %663 = vset.pattern.permute.xlu0 0
      %664 = vperm.xlu0 %663, %v390
      %v665 = vpop.permute.xlu0 %664
      %668 = vset.pattern.permute.xlu0 0
      %669 = vperm.xlu0 %668, %v391
      %v670 = vpop.permute.xlu0 %669
      %673 = vset.pattern.permute.xlu0 0
      %674 = vperm.xlu0 %673, %v392
      %v675 = vpop.permute.xlu0 %674
      %678 = vset.pattern.permute.xlu0 0
      %679 = vperm.xlu0 %678, %v393
      %v680 = vpop.permute.xlu0 %679
      %683 = vset.pattern.permute.xlu0 0
      %684 = vperm.xlu0 %683, %v394
      %v685 = vpop.permute.xlu0 %684
      %688 = vset.pattern.permute.xlu0 0
      %689 = vperm.xlu0 %688, %v395
      %v690 = vpop.permute.xlu0 %689
      %693 = vset.pattern.permute.xlu0 0
      %694 = vperm.xlu0 %693, %v396
      %v695 = vpop.permute.xlu0 %694
      %698 = vset.pattern.permute.xlu0 0
      %699 = vperm.xlu0 %698, %v397
      %v700 = vpop.permute.xlu0 %699
      %703 = vset.pattern.permute.xlu0 0
      %704 = vperm.xlu0 %703, %v398
      %v705 = vpop.permute.xlu0 %704
      %708 = vset.pattern.permute.xlu0 0
      %709 = vperm.xlu0 %708, %v399
      %v710 = vpop.permute.xlu0 %709
      %713 = vset.pattern.permute.xlu0 0
      %714 = vperm.xlu0 %713, %v400
      %v715 = vpop.permute.xlu0 %714
      %v717 = vperm.slane %v401, 0
      %v718 = vmul.f32 %v405, %v717
      %v719 = vmul.f32 %v410, %v717
      %v720 = vmul.f32 %v415, %v717
      %v721 = vmul.f32 %v420, %v717
      %v722 = vmul.f32 %v425, %v717
      %v723 = vmul.f32 %v430, %v717
      %v724 = vmul.f32 %v435, %v717
      %v725 = vmul.f32 %v440, %v717
      %v726 = vmul.f32 %v445, %v717
      %v727 = vmul.f32 %v450, %v717
      %v728 = vmul.f32 %v455, %v717
      %v729 = vmul.f32 %v460, %v717
      %v730 = vmul.f32 %v465, %v717
      %v731 = vmul.f32 %v470, %v717
      %v732 = vmul.f32 %v475, %v717
      %v733 = vmul.f32 %v480, %v717
      %v734 = vmul.f32 %v485, %v717
      %v735 = vmul.f32 %v490, %v717
      %v736 = vmul.f32 %v495, %v717
      %v737 = vmul.f32 %v500, %v717
      %v738 = vmul.f32 %v505, %v717
      %v739 = vmul.f32 %v510, %v717
      %v740 = vmul.f32 %v515, %v717
      %v741 = vmul.f32 %v520, %v717
      %v742 = vmul.f32 %v525, %v717
      %v743 = vmul.f32 %v530, %v717
      %v744 = vmul.f32 %v535, %v717
      %v745 = vmul.f32 %v540, %v717
      %v746 = vmul.f32 %v545, %v717
      %v747 = vmul.f32 %v550, %v717
      %v748 = vmul.f32 %v555, %v717
      %v749 = vmul.f32 %v560, %v717
      %v750 = vmul.f32 %v565, %v717
      %v751 = vmul.f32 %v570, %v717
      %v752 = vmul.f32 %v575, %v717
      %v753 = vmul.f32 %v580, %v717
      %v754 = vmul.f32 %v585, %v717
      %v755 = vmul.f32 %v590, %v717
      %v756 = vmul.f32 %v595, %v717
      %v757 = vmul.f32 %v600, %v717
      %v758 = vmul.f32 %v605, %v717
      %v759 = vmul.f32 %v610, %v717
      %v760 = vmul.f32 %v615, %v717
      %v761 = vmul.f32 %v620, %v717
      %v762 = vmul.f32 %v625, %v717
      %v763 = vmul.f32 %v630, %v717
      %v764 = vmul.f32 %v635, %v717
      %v765 = vmul.f32 %v640, %v717
      %v766 = vmul.f32 %v645, %v717
      %v767 = vmul.f32 %v650, %v717
      %v768 = vmul.f32 %v655, %v717
      %v769 = vmul.f32 %v660, %v717
      %v770 = vmul.f32 %v665, %v717
      %v771 = vmul.f32 %v670, %v717
      %v772 = vmul.f32 %v675, %v717
      %v773 = vmul.f32 %v680, %v717
      %v774 = vmul.f32 %v685, %v717
      %v775 = vmul.f32 %v690, %v717
      %v776 = vmul.f32 %v695, %v717
      %v777 = vmul.f32 %v700, %v717
      %v778 = vmul.f32 %v705, %v717
      %v779 = vmul.f32 %v710, %v717
      %v780 = vmul.f32 %v715, %v717
      %781 = vset.pattern.permute.xlu0 1
      %782 = vperm.xlu0 %781, %v338
      %v783 = vpop.permute.xlu0 %782
      %785 = vset.pattern.permute.xlu0 1
      %786 = vperm.xlu0 %785, %v339
      %v787 = vpop.permute.xlu0 %786
      %789 = vset.pattern.permute.xlu0 1
      %790 = vperm.xlu0 %789, %v340
      %v791 = vpop.permute.xlu0 %790
      %793 = vset.pattern.permute.xlu0 1
      %794 = vperm.xlu0 %793, %v341
      %v795 = vpop.permute.xlu0 %794
      %797 = vset.pattern.permute.xlu0 1
      %798 = vperm.xlu0 %797, %v342
      %v799 = vpop.permute.xlu0 %798
      %801 = vset.pattern.permute.xlu0 1
      %802 = vperm.xlu0 %801, %v343
      %v803 = vpop.permute.xlu0 %802
      %805 = vset.pattern.permute.xlu0 1
      %806 = vperm.xlu0 %805, %v344
      %v807 = vpop.permute.xlu0 %806
      %809 = vset.pattern.permute.xlu0 1
      %810 = vperm.xlu0 %809, %v345
      %v811 = vpop.permute.xlu0 %810
      %813 = vset.pattern.permute.xlu0 1
      %814 = vperm.xlu0 %813, %v346
      %v815 = vpop.permute.xlu0 %814
      %817 = vset.pattern.permute.xlu0 1
      %818 = vperm.xlu0 %817, %v347
      %v819 = vpop.permute.xlu0 %818
      %821 = vset.pattern.permute.xlu0 1
      %822 = vperm.xlu0 %821, %v348
      %v823 = vpop.permute.xlu0 %822
      %825 = vset.pattern.permute.xlu0 1
      %826 = vperm.xlu0 %825, %v349
      %v827 = vpop.permute.xlu0 %826
      %829 = vset.pattern.permute.xlu0 1
      %830 = vperm.xlu0 %829, %v350
      %v831 = vpop.permute.xlu0 %830
      %833 = vset.pattern.permute.xlu0 1
      %834 = vperm.xlu0 %833, %v351
      %v835 = vpop.permute.xlu0 %834
      %837 = vset.pattern.permute.xlu0 1
      %838 = vperm.xlu0 %837, %v352
      %v839 = vpop.permute.xlu0 %838
      %841 = vset.pattern.permute.xlu0 1
      %842 = vperm.xlu0 %841, %v353
      %v843 = vpop.permute.xlu0 %842
      %845 = vset.pattern.permute.xlu0 1
      %846 = vperm.xlu0 %845, %v354
      %v847 = vpop.permute.xlu0 %846
      %849 = vset.pattern.permute.xlu0 1
      %850 = vperm.xlu0 %849, %v355
      %v851 = vpop.permute.xlu0 %850
      %853 = vset.pattern.permute.xlu0 1
      %854 = vperm.xlu0 %853, %v356
      %v855 = vpop.permute.xlu0 %854
      %857 = vset.pattern.permute.xlu0 1
      %858 = vperm.xlu0 %857, %v357
      %v859 = vpop.permute.xlu0 %858
      %861 = vset.pattern.permute.xlu0 1
      %862 = vperm.xlu0 %861, %v358
      %v863 = vpop.permute.xlu0 %862
      %865 = vset.pattern.permute.xlu0 1
      %866 = vperm.xlu0 %865, %v359
      %v867 = vpop.permute.xlu0 %866
      %869 = vset.pattern.permute.xlu0 1
      %870 = vperm.xlu0 %869, %v360
      %v871 = vpop.permute.xlu0 %870
      %873 = vset.pattern.permute.xlu0 1
      %874 = vperm.xlu0 %873, %v361
      %v875 = vpop.permute.xlu0 %874
      %877 = vset.pattern.permute.xlu0 1
      %878 = vperm.xlu0 %877, %v362
      %v879 = vpop.permute.xlu0 %878
      %881 = vset.pattern.permute.xlu0 1
      %882 = vperm.xlu0 %881, %v363
      %v883 = vpop.permute.xlu0 %882
      %885 = vset.pattern.permute.xlu0 1
      %886 = vperm.xlu0 %885, %v364
      %v887 = vpop.permute.xlu0 %886
      %889 = vset.pattern.permute.xlu0 1
      %890 = vperm.xlu0 %889, %v365
      %v891 = vpop.permute.xlu0 %890
      %893 = vset.pattern.permute.xlu0 1
      %894 = vperm.xlu0 %893, %v366
      %v895 = vpop.permute.xlu0 %894
      %897 = vset.pattern.permute.xlu0 1
      %898 = vperm.xlu0 %897, %v367
      %v899 = vpop.permute.xlu0 %898
      %901 = vset.pattern.permute.xlu0 1
      %902 = vperm.xlu0 %901, %v368
      %v903 = vpop.permute.xlu0 %902
      %905 = vset.pattern.permute.xlu0 1
      %906 = vperm.xlu0 %905, %v369
      %v907 = vpop.permute.xlu0 %906
      %909 = vset.pattern.permute.xlu0 1
      %910 = vperm.xlu0 %909, %v370
      %v911 = vpop.permute.xlu0 %910
      %913 = vset.pattern.permute.xlu0 1
      %914 = vperm.xlu0 %913, %v371
      %v915 = vpop.permute.xlu0 %914
      %917 = vset.pattern.permute.xlu0 1
      %918 = vperm.xlu0 %917, %v372
      %v919 = vpop.permute.xlu0 %918
      %921 = vset.pattern.permute.xlu0 1
      %922 = vperm.xlu0 %921, %v373
      %v923 = vpop.permute.xlu0 %922
      %925 = vset.pattern.permute.xlu0 1
      %926 = vperm.xlu0 %925, %v374
      %v927 = vpop.permute.xlu0 %926
      %929 = vset.pattern.permute.xlu0 1
      %930 = vperm.xlu0 %929, %v375
      %v931 = vpop.permute.xlu0 %930
      %933 = vset.pattern.permute.xlu0 1
      %934 = vperm.xlu0 %933, %v376
      %v935 = vpop.permute.xlu0 %934
      %937 = vset.pattern.permute.xlu0 1
      %938 = vperm.xlu0 %937, %v377
      %v939 = vpop.permute.xlu0 %938
      %941 = vset.pattern.permute.xlu0 1
      %942 = vperm.xlu0 %941, %v378
      %v943 = vpop.permute.xlu0 %942
      %945 = vset.pattern.permute.xlu0 1
      %946 = vperm.xlu0 %945, %v379
      %v947 = vpop.permute.xlu0 %946
      %949 = vset.pattern.permute.xlu0 1
      %950 = vperm.xlu0 %949, %v380
      %v951 = vpop.permute.xlu0 %950
      %953 = vset.pattern.permute.xlu0 1
      %954 = vperm.xlu0 %953, %v381
      %v955 = vpop.permute.xlu0 %954
      %957 = vset.pattern.permute.xlu0 1
      %958 = vperm.xlu0 %957, %v382
      %v959 = vpop.permute.xlu0 %958
      %961 = vset.pattern.permute.xlu0 1
      %962 = vperm.xlu0 %961, %v383
      %v963 = vpop.permute.xlu0 %962
      %965 = vset.pattern.permute.xlu0 1
      %966 = vperm.xlu0 %965, %v384
      %v967 = vpop.permute.xlu0 %966
      %969 = vset.pattern.permute.xlu0 1
      %970 = vperm.xlu0 %969, %v385
      %v971 = vpop.permute.xlu0 %970
      %973 = vset.pattern.permute.xlu0 1
      %974 = vperm.xlu0 %973, %v386
      %v975 = vpop.permute.xlu0 %974
      %977 = vset.pattern.permute.xlu0 1
      %978 = vperm.xlu0 %977, %v387
      %v979 = vpop.permute.xlu0 %978
      %981 = vset.pattern.permute.xlu0 1
      %982 = vperm.xlu0 %981, %v388
      %v983 = vpop.permute.xlu0 %982
      %985 = vset.pattern.permute.xlu0 1
      %986 = vperm.xlu0 %985, %v389
      %v987 = vpop.permute.xlu0 %986
      %989 = vset.pattern.permute.xlu0 1
      %990 = vperm.xlu0 %989, %v390
      %v991 = vpop.permute.xlu0 %990
      %993 = vset.pattern.permute.xlu0 1
      %994 = vperm.xlu0 %993, %v391
      %v995 = vpop.permute.xlu0 %994
      %997 = vset.pattern.permute.xlu0 1
      %998 = vperm.xlu0 %997, %v392
      %v999 = vpop.permute.xlu0 %998
      %1001 = vset.pattern.permute.xlu0 1
      %1002 = vperm.xlu0 %1001, %v393
      %v1003 = vpop.permute.xlu0 %1002
      %1005 = vset.pattern.permute.xlu0 1
      %1006 = vperm.xlu0 %1005, %v394
      %v1007 = vpop.permute.xlu0 %1006
      %1009 = vset.pattern.permute.xlu0 1
      %1010 = vperm.xlu0 %1009, %v395
      %v1011 = vpop.permute.xlu0 %1010
      %1013 = vset.pattern.permute.xlu0 1
      %1014 = vperm.xlu0 %1013, %v396
      %v1015 = vpop.permute.xlu0 %1014
      %1017 = vset.pattern.permute.xlu0 1
      %1018 = vperm.xlu0 %1017, %v397
      %v1019 = vpop.permute.xlu0 %1018
      %1021 = vset.pattern.permute.xlu0 1
      %1022 = vperm.xlu0 %1021, %v398
      %v1023 = vpop.permute.xlu0 %1022
      %1025 = vset.pattern.permute.xlu0 1
      %1026 = vperm.xlu0 %1025, %v399
      %v1027 = vpop.permute.xlu0 %1026
      %1029 = vset.pattern.permute.xlu0 1
      %1030 = vperm.xlu0 %1029, %v400
      %v1031 = vpop.permute.xlu0 %1030
      %v1033 = vperm.slane %v401, 1
      %v1034 = vmul.f32 %v783, %v1033
      %v1035 = vmul.f32 %v787, %v1033
      %v1036 = vmul.f32 %v791, %v1033
      %v1037 = vmul.f32 %v795, %v1033
      %v1038 = vmul.f32 %v799, %v1033
      %v1039 = vmul.f32 %v803, %v1033
      %v1040 = vmul.f32 %v807, %v1033
      %v1041 = vmul.f32 %v811, %v1033
      %v1042 = vmul.f32 %v815, %v1033
      %v1043 = vmul.f32 %v819, %v1033
      %v1044 = vmul.f32 %v823, %v1033
      %v1045 = vmul.f32 %v827, %v1033
      %v1046 = vmul.f32 %v831, %v1033
      %v1047 = vmul.f32 %v835, %v1033
      %v1048 = vmul.f32 %v839, %v1033
      %v1049 = vmul.f32 %v843, %v1033
      %v1050 = vmul.f32 %v847, %v1033
      %v1051 = vmul.f32 %v851, %v1033
      %v1052 = vmul.f32 %v855, %v1033
      %v1053 = vmul.f32 %v859, %v1033
      %v1054 = vmul.f32 %v863, %v1033
      %v1055 = vmul.f32 %v867, %v1033
      %v1056 = vmul.f32 %v871, %v1033
      %v1057 = vmul.f32 %v875, %v1033
      %v1058 = vmul.f32 %v879, %v1033
      %v1059 = vmul.f32 %v883, %v1033
      %v1060 = vmul.f32 %v887, %v1033
      %v1061 = vmul.f32 %v891, %v1033
      %v1062 = vmul.f32 %v895, %v1033
      %v1063 = vmul.f32 %v899, %v1033
      %v1064 = vmul.f32 %v903, %v1033
      %v1065 = vmul.f32 %v907, %v1033
      %v1066 = vmul.f32 %v911, %v1033
      %v1067 = vmul.f32 %v915, %v1033
      %v1068 = vmul.f32 %v919, %v1033
      %v1069 = vmul.f32 %v923, %v1033
      %v1070 = vmul.f32 %v927, %v1033
      %v1071 = vmul.f32 %v931, %v1033
      %v1072 = vmul.f32 %v935, %v1033
      %v1073 = vmul.f32 %v939, %v1033
      %v1074 = vmul.f32 %v943, %v1033
      %v1075 = vmul.f32 %v947, %v1033
      %v1076 = vmul.f32 %v951, %v1033
      %v1077 = vmul.f32 %v955, %v1033
      %v1078 = vmul.f32 %v959, %v1033
      %v1079 = vmul.f32 %v963, %v1033
      %v1080 = vmul.f32 %v967, %v1033
      %v1081 = vmul.f32 %v971, %v1033
      %v1082 = vmul.f32 %v975, %v1033
      %v1083 = vmul.f32 %v979, %v1033
      %v1084 = vmul.f32 %v983, %v1033
      %v1085 = vmul.f32 %v987, %v1033
      %v1086 = vmul.f32 %v991, %v1033
      %v1087 = vmul.f32 %v995, %v1033
      %v1088 = vmul.f32 %v999, %v1033
      %v1089 = vmul.f32 %v1003, %v1033
      %v1090 = vmul.f32 %v1007, %v1033
      %v1091 = vmul.f32 %v1011, %v1033
      %v1092 = vmul.f32 %v1015, %v1033
      %v1093 = vmul.f32 %v1019, %v1033
      %v1094 = vmul.f32 %v1023, %v1033
      %v1095 = vmul.f32 %v1027, %v1033
      %v1096 = vmul.f32 %v1031, %v1033
      %v1097 = vadd.f32 %v718, %v1034
      %v1098 = vadd.f32 %v719, %v1035
      %v1099 = vadd.f32 %v720, %v1036
      %v1100 = vadd.f32 %v721, %v1037
      %v1101 = vadd.f32 %v722, %v1038
      %v1102 = vadd.f32 %v723, %v1039
      %v1103 = vadd.f32 %v724, %v1040
      %v1104 = vadd.f32 %v725, %v1041
      %v1105 = vadd.f32 %v726, %v1042
      %v1106 = vadd.f32 %v727, %v1043
      %v1107 = vadd.f32 %v728, %v1044
      %v1108 = vadd.f32 %v729, %v1045
      %v1109 = vadd.f32 %v730, %v1046
      %v1110 = vadd.f32 %v731, %v1047
      %v1111 = vadd.f32 %v732, %v1048
      %v1112 = vadd.f32 %v733, %v1049
      %v1113 = vadd.f32 %v734, %v1050
      %v1114 = vadd.f32 %v735, %v1051
      %v1115 = vadd.f32 %v736, %v1052
      %v1116 = vadd.f32 %v737, %v1053
      %v1117 = vadd.f32 %v738, %v1054
      %v1118 = vadd.f32 %v739, %v1055
      %v1119 = vadd.f32 %v740, %v1056
      %v1120 = vadd.f32 %v741, %v1057
      %v1121 = vadd.f32 %v742, %v1058
      %v1122 = vadd.f32 %v743, %v1059
      %v1123 = vadd.f32 %v744, %v1060
      %v1124 = vadd.f32 %v745, %v1061
      %v1125 = vadd.f32 %v746, %v1062
      %v1126 = vadd.f32 %v747, %v1063
      %v1127 = vadd.f32 %v748, %v1064
      %v1128 = vadd.f32 %v749, %v1065
      %v1129 = vadd.f32 %v750, %v1066
      %v1130 = vadd.f32 %v751, %v1067
      %v1131 = vadd.f32 %v752, %v1068
      %v1132 = vadd.f32 %v753, %v1069
      %v1133 = vadd.f32 %v754, %v1070
      %v1134 = vadd.f32 %v755, %v1071
      %v1135 = vadd.f32 %v756, %v1072
      %v1136 = vadd.f32 %v757, %v1073
      %v1137 = vadd.f32 %v758, %v1074
      %v1138 = vadd.f32 %v759, %v1075
      %v1139 = vadd.f32 %v760, %v1076
      %v1140 = vadd.f32 %v761, %v1077
      %v1141 = vadd.f32 %v762, %v1078
      %v1142 = vadd.f32 %v763, %v1079
      %v1143 = vadd.f32 %v764, %v1080
      %v1144 = vadd.f32 %v765, %v1081
      %v1145 = vadd.f32 %v766, %v1082
      %v1146 = vadd.f32 %v767, %v1083
      %v1147 = vadd.f32 %v768, %v1084
      %v1148 = vadd.f32 %v769, %v1085
      %v1149 = vadd.f32 %v770, %v1086
      %v1150 = vadd.f32 %v771, %v1087
      %v1151 = vadd.f32 %v772, %v1088
      %v1152 = vadd.f32 %v773, %v1089
      %v1153 = vadd.f32 %v774, %v1090
      %v1154 = vadd.f32 %v775, %v1091
      %v1155 = vadd.f32 %v776, %v1092
      %v1156 = vadd.f32 %v777, %v1093
      %v1157 = vadd.f32 %v778, %v1094
      %v1158 = vadd.f32 %v779, %v1095
      %v1159 = vadd.f32 %v780, %v1096
      %v1160 = vld [vmem:[%s2] sm:$0x1]
      %v1162 = vperm.slane %v1160, 0
      %v1164 = vadd.f32 %v1097, %v1162
      %v1165 = vadd.f32 %v1098, %v1162
      %v1166 = vadd.f32 %v1099, %v1162
      %v1167 = vadd.f32 %v1100, %v1162
      %v1168 = vadd.f32 %v1101, %v1162
      %v1169 = vadd.f32 %v1102, %v1162
      %v1170 = vadd.f32 %v1103, %v1162
      %v1171 = vadd.f32 %v1104, %v1162
      %v1172 = vadd.f32 %v1105, %v1162
      %v1173 = vadd.f32 %v1106, %v1162
      %v1174 = vadd.f32 %v1107, %v1162
      %v1175 = vadd.f32 %v1108, %v1162
      %v1176 = vadd.f32 %v1109, %v1162
      %v1177 = vadd.f32 %v1110, %v1162
      %v1178 = vadd.f32 %v1111, %v1162
      %v1179 = vadd.f32 %v1112, %v1162
      %v1180 = vadd.f32 %v1113, %v1162
      %v1181 = vadd.f32 %v1114, %v1162
      %v1182 = vadd.f32 %v1115, %v1162
      %v1183 = vadd.f32 %v1116, %v1162
      %v1184 = vadd.f32 %v1117, %v1162
      %v1185 = vadd.f32 %v1118, %v1162
      %v1186 = vadd.f32 %v1119, %v1162
      %v1187 = vadd.f32 %v1120, %v1162
      %v1188 = vadd.f32 %v1121, %v1162
      %v1189 = vadd.f32 %v1122, %v1162
      %v1190 = vadd.f32 %v1123, %v1162
      %v1191 = vadd.f32 %v1124, %v1162
      %v1192 = vadd.f32 %v1125, %v1162
      %v1193 = vadd.f32 %v1126, %v1162
      %v1194 = vadd.f32 %v1127, %v1162
      %v1195 = vadd.f32 %v1128, %v1162
      %v1196 = vadd.f32 %v1129, %v1162
      %v1197 = vadd.f32 %v1130, %v1162
      %v1198 = vadd.f32 %v1131, %v1162
      %v1199 = vadd.f32 %v1132, %v1162
      %v1200 = vadd.f32 %v1133, %v1162
      %v1201 = vadd.f32 %v1134, %v1162
      %v1202 = vadd.f32 %v1135, %v1162
      %v1203 = vadd.f32 %v1136, %v1162
      %v1204 = vadd.f32 %v1137, %v1162
      %v1205 = vadd.f32 %v1138, %v1162
      %v1206 = vadd.f32 %v1139, %v1162
      %v1207 = vadd.f32 %v1140, %v1162
      %v1208 = vadd.f32 %v1141, %v1162
      %v1209 = vadd.f32 %v1142, %v1162
      %v1210 = vadd.f32 %v1143, %v1162
      %v1211 = vadd.f32 %v1144, %v1162
      %v1212 = vadd.f32 %v1145, %v1162
      %v1213 = vadd.f32 %v1146, %v1162
      %v1214 = vadd.f32 %v1147, %v1162
      %v1215 = vadd.f32 %v1148, %v1162
      %v1216 = vadd.f32 %v1149, %v1162
      %v1217 = vadd.f32 %v1150, %v1162
      %v1218 = vadd.f32 %v1151, %v1162
      %v1219 = vadd.f32 %v1152, %v1162
      %v1220 = vadd.f32 %v1153, %v1162
      %v1221 = vadd.f32 %v1154, %v1162
      %v1222 = vadd.f32 %v1155, %v1162
      %v1223 = vadd.f32 %v1156, %v1162
      %v1224 = vadd.f32 %v1157, %v1162
      %v1225 = vadd.f32 %v1158, %v1162
      %v1226 = vadd.f32 %v1159, %v1162
      %v1227 = vtanh.pop %v1164
      %v1228 = vtanh.pop %v1165
      %v1229 = vtanh.pop %v1166
      %v1230 = vtanh.pop %v1167
      %v1231 = vtanh.pop %v1168
      %v1232 = vtanh.pop %v1169
      %v1233 = vtanh.pop %v1170
      %v1234 = vtanh.pop %v1171
      %v1235 = vtanh.pop %v1172
      %v1236 = vtanh.pop %v1173
      %v1237 = vtanh.pop %v1174
      %v1238 = vtanh.pop %v1175
      %v1239 = vtanh.pop %v1176
      %v1240 = vtanh.pop %v1177
      %v1241 = vtanh.pop %v1178
      %v1242 = vtanh.pop %v1179
      %v1243 = vtanh.pop %v1180
      %v1244 = vtanh.pop %v1181
      %v1245 = vtanh.pop %v1182
      %v1246 = vtanh.pop %v1183
      %v1247 = vtanh.pop %v1184
      %v1248 = vtanh.pop %v1185
      %v1249 = vtanh.pop %v1186
      %v1250 = vtanh.pop %v1187
      %v1251 = vtanh.pop %v1188
      %v1252 = vtanh.pop %v1189
      %v1253 = vtanh.pop %v1190
      %v1254 = vtanh.pop %v1191
      %v1255 = vtanh.pop %v1192
      %v1256 = vtanh.pop %v1193
      %v1257 = vtanh.pop %v1194
      %v1258 = vtanh.pop %v1195
      %v1259 = vtanh.pop %v1196
      %v1260 = vtanh.pop %v1197
      %v1261 = vtanh.pop %v1198
      %v1262 = vtanh.pop %v1199
      %v1263 = vtanh.pop %v1200
      %v1264 = vtanh.pop %v1201
      %v1265 = vtanh.pop %v1202
      %v1266 = vtanh.pop %v1203
      %v1267 = vtanh.pop %v1204
      %v1268 = vtanh.pop %v1205
      %v1269 = vtanh.pop %v1206
      %v1270 = vtanh.pop %v1207
      %v1271 = vtanh.pop %v1208
      %v1272 = vtanh.pop %v1209
      %v1273 = vtanh.pop %v1210
      %v1274 = vtanh.pop %v1211
      %v1275 = vtanh.pop %v1212
      %v1276 = vtanh.pop %v1213
      %v1277 = vtanh.pop %v1214
      %v1278 = vtanh.pop %v1215
      %v1279 = vtanh.pop %v1216
      %v1280 = vtanh.pop %v1217
      %v1281 = vtanh.pop %v1218
      %v1282 = vtanh.pop %v1219
      %v1283 = vtanh.pop %v1220
      %v1284 = vtanh.pop %v1221
      %v1285 = vtanh.pop %v1222
      %v1286 = vtanh.pop %v1223
      %v1287 = vtanh.pop %v1224
      %v1288 = vtanh.pop %v1225
      %v1289 = vtanh.pop %v1226
      %v1290 = vld [vmem:[%s3] sm:$0xff]
      %v1291 = vld [vmem:[%s3 + $0x8] sm:$0xff]
      %v1292 = vld [vmem:[%s3 + $0x10] sm:$0xff]
      %v1293 = vld [vmem:[%s3 + $0x18] sm:$0xff]
      %v1294 = vld [vmem:[%s3 + $0x20] sm:$0xff]
      %v1295 = vld [vmem:[%s3 + $0x28] sm:$0xff]
      %v1296 = vld [vmem:[%s3 + $0x30] sm:$0xff]
      %v1297 = vld [vmem:[%s3 + $0x38] sm:$0xff]
      %v1298 = vld [vmem:[%s3 + $0x40] sm:$0xff]
      %v1299 = vld [vmem:[%s3 + $0x48] sm:$0xff]
      %v1300 = vld [vmem:[%s3 + $0x50] sm:$0xff]
      %v1301 = vld [vmem:[%s3 + $0x58] sm:$0xff]
      %v1302 = vld [vmem:[%s3 + $0x60] sm:$0xff]
      %v1303 = vld [vmem:[%s3 + $0x68] sm:$0xff]
      %v1304 = vld [vmem:[%s3 + $0x70] sm:$0xff]
      %v1305 = vld [vmem:[%s3 + $0x78] sm:$0xff]
      %v1306 = vld [vmem:[%s4] sm:$0x1]
      %v1308 = vperm.slane %v1306, 0
      %1310 = vmatpush.msra.mxu0 %v1305
      %1311 = vmatpush.msra.mxu0 %v1304
      %1312 = vmatpush.msra.mxu0 %v1303
      %1313 = vmatpush.msra.mxu0 %v1302
      %1314 = vmatpush.msra.mxu0 %v1301
      %1315 = vmatpush.msra.mxu0 %v1300
      %1316 = vmatpush.msra.mxu0 %v1299
      %1317 = vmatpush.msra.mxu0 %v1298
      %1318 = vmatpush.msra.mxu0 %v1297
      %1319 = vmatpush.msra.mxu0 %v1296
      %1320 = vmatpush.msra.mxu0 %v1295
      %1321 = vmatpush.msra.mxu0 %v1294
      %1322 = vmatpush.msra.mxu0 %v1293
      %1323 = vmatpush.msra.mxu0 %v1292
      %1324 = vmatpush.msra.mxu0 %v1291
      %1325 = vmatpush.msra.mxu0 %v1290
      %1326 = vmatmul.f32.gmra.mxu0 %v1227
      %v1327 = vpop.f32.mrf.mxu0
      %v1328 = vadd.f32 %v1308, %v1327
      %1329 = vmatmul.f32.gmra.mxu0 %v1228
      %v1330 = vpop.f32.mrf.mxu0
      %v1331 = vadd.f32 %v1308, %v1330
      %1332 = vmatmul.f32.gmra.mxu0 %v1229
      %v1333 = vpop.f32.mrf.mxu0
      %v1334 = vadd.f32 %v1308, %v1333
      %1335 = vmatmul.f32.gmra.mxu0 %v1230
      %v1336 = vpop.f32.mrf.mxu0
      %v1337 = vadd.f32 %v1308, %v1336
      %1338 = vmatmul.f32.gmra.mxu0 %v1231
      %v1339 = vpop.f32.mrf.mxu0
      %v1340 = vadd.f32 %v1308, %v1339
      %1341 = vmatmul.f32.gmra.mxu0 %v1232
      %v1342 = vpop.f32.mrf.mxu0
      %v1343 = vadd.f32 %v1308, %v1342
      %1344 = vmatmul.f32.gmra.mxu0 %v1233
      %v1345 = vpop.f32.mrf.mxu0
      %v1346 = vadd.f32 %v1308, %v1345
      %1347 = vmatmul.f32.gmra.mxu0 %v1234
      %v1348 = vpop.f32.mrf.mxu0
      %v1349 = vadd.f32 %v1308, %v1348
      %1350 = vmatmul.f32.gmra.mxu0 %v1235
      %v1351 = vpop.f32.mrf.mxu0
      %v1352 = vadd.f32 %v1308, %v1351
      %1353 = vmatmul.f32.gmra.mxu0 %v1236
      %v1354 = vpop.f32.mrf.mxu0
      %v1355 = vadd.f32 %v1308, %v1354
      %1356 = vmatmul.f32.gmra.mxu0 %v1237
      %v1357 = vpop.f32.mrf.mxu0
      %v1358 = vadd.f32 %v1308, %v1357
      %1359 = vmatmul.f32.gmra.mxu0 %v1238
      %v1360 = vpop.f32.mrf.mxu0
      %v1361 = vadd.f32 %v1308, %v1360
      %1362 = vmatmul.f32.gmra.mxu0 %v1239
      %v1363 = vpop.f32.mrf.mxu0
      %v1364 = vadd.f32 %v1308, %v1363
      %1365 = vmatmul.f32.gmra.mxu0 %v1240
      %v1366 = vpop.f32.mrf.mxu0
      %v1367 = vadd.f32 %v1308, %v1366
      %1368 = vmatmul.f32.gmra.mxu0 %v1241
      %v1369 = vpop.f32.mrf.mxu0
      %v1370 = vadd.f32 %v1308, %v1369
      %1371 = vmatmul.f32.gmra.mxu0 %v1242
      %v1372 = vpop.f32.mrf.mxu0
      %v1373 = vadd.f32 %v1308, %v1372
      %1374 = vmatmul.f32.gmra.mxu0 %v1243
      %v1375 = vpop.f32.mrf.mxu0
      %v1376 = vadd.f32 %v1308, %v1375
      %1377 = vmatmul.f32.gmra.mxu0 %v1244
      %v1378 = vpop.f32.mrf.mxu0
      %v1379 = vadd.f32 %v1308, %v1378
      %1380 = vmatmul.f32.gmra.mxu0 %v1245
      %v1381 = vpop.f32.mrf.mxu0
      %v1382 = vadd.f32 %v1308, %v1381
      %1383 = vmatmul.f32.gmra.mxu0 %v1246
      %v1384 = vpop.f32.mrf.mxu0
      %v1385 = vadd.f32 %v1308, %v1384
      %1386 = vmatmul.f32.gmra.mxu0 %v1247
      %v1387 = vpop.f32.mrf.mxu0
      %v1388 = vadd.f32 %v1308, %v1387
      %1389 = vmatmul.f32.gmra.mxu0 %v1248
      %v1390 = vpop.f32.mrf.mxu0
      %v1391 = vadd.f32 %v1308, %v1390
      %1392 = vmatmul.f32.gmra.mxu0 %v1249
      %v1393 = vpop.f32.mrf.mxu0
      %v1394 = vadd.f32 %v1308, %v1393
      %1395 = vmatmul.f32.gmra.mxu0 %v1250
      %v1396 = vpop.f32.mrf.mxu0
      %v1397 = vadd.f32 %v1308, %v1396
      %1398 = vmatmul.f32.gmra.mxu0 %v1251
      %v1399 = vpop.f32.mrf.mxu0
      %v1400 = vadd.f32 %v1308, %v1399
      %1401 = vmatmul.f32.gmra.mxu0 %v1252
      %v1402 = vpop.f32.mrf.mxu0
      %v1403 = vadd.f32 %v1308, %v1402
      %1404 = vmatmul.f32.gmra.mxu0 %v1253
      %v1405 = vpop.f32.mrf.mxu0
      %v1406 = vadd.f32 %v1308, %v1405
      %1407 = vmatmul.f32.gmra.mxu0 %v1254
      %v1408 = vpop.f32.mrf.mxu0
      %v1409 = vadd.f32 %v1308, %v1408
      %1410 = vmatmul.f32.gmra.mxu0 %v1255
      %v1411 = vpop.f32.mrf.mxu0
      %v1412 = vadd.f32 %v1308, %v1411
      %1413 = vmatmul.f32.gmra.mxu0 %v1256
      %v1414 = vpop.f32.mrf.mxu0
      %v1415 = vadd.f32 %v1308, %v1414
      %1416 = vmatmul.f32.gmra.mxu0 %v1257
      %v1417 = vpop.f32.mrf.mxu0
      %v1418 = vadd.f32 %v1308, %v1417
      %1419 = vmatmul.f32.gmra.mxu0 %v1258
      %v1420 = vpop.f32.mrf.mxu0
      %v1421 = vadd.f32 %v1308, %v1420
      %1422 = vmatmul.f32.gmra.mxu0 %v1259
      %v1423 = vpop.f32.mrf.mxu0
      %v1424 = vadd.f32 %v1308, %v1423
      %1425 = vmatmul.f32.gmra.mxu0 %v1260
      %v1426 = vpop.f32.mrf.mxu0
      %v1427 = vadd.f32 %v1308, %v1426
      %1428 = vmatmul.f32.gmra.mxu0 %v1261
      %v1429 = vpop.f32.mrf.mxu0
      %v1430 = vadd.f32 %v1308, %v1429
      %1431 = vmatmul.f32.gmra.mxu0 %v1262
      %v1432 = vpop.f32.mrf.mxu0
      %v1433 = vadd.f32 %v1308, %v1432
      %1434 = vmatmul.f32.gmra.mxu0 %v1263
      %v1435 = vpop.f32.mrf.mxu0
      %v1436 = vadd.f32 %v1308, %v1435
      %1437 = vmatmul.f32.gmra.mxu0 %v1264
      %v1438 = vpop.f32.mrf.mxu0
      %v1439 = vadd.f32 %v1308, %v1438
      %1440 = vmatmul.f32.gmra.mxu0 %v1265
      %v1441 = vpop.f32.mrf.mxu0
      %v1442 = vadd.f32 %v1308, %v1441
      %1443 = vmatmul.f32.gmra.mxu0 %v1266
      %v1444 = vpop.f32.mrf.mxu0
      %v1445 = vadd.f32 %v1308, %v1444
      %1446 = vmatmul.f32.gmra.mxu0 %v1267
      %v1447 = vpop.f32.mrf.mxu0
      %v1448 = vadd.f32 %v1308, %v1447
      %1449 = vmatmul.f32.gmra.mxu0 %v1268
      %v1450 = vpop.f32.mrf.mxu0
      %v1451 = vadd.f32 %v1308, %v1450
      %1452 = vmatmul.f32.gmra.mxu0 %v1269
      %v1453 = vpop.f32.mrf.mxu0
      %v1454 = vadd.f32 %v1308, %v1453
      %1455 = vmatmul.f32.gmra.mxu0 %v1270
      %v1456 = vpop.f32.mrf.mxu0
      %v1457 = vadd.f32 %v1308, %v1456
      %1458 = vmatmul.f32.gmra.mxu0 %v1271
      %v1459 = vpop.f32.mrf.mxu0
      %v1460 = vadd.f32 %v1308, %v1459
      %1461 = vmatmul.f32.gmra.mxu0 %v1272
      %v1462 = vpop.f32.mrf.mxu0
      %v1463 = vadd.f32 %v1308, %v1462
      %1464 = vmatmul.f32.gmra.mxu0 %v1273
      %v1465 = vpop.f32.mrf.mxu0
      %v1466 = vadd.f32 %v1308, %v1465
      %1467 = vmatmul.f32.gmra.mxu0 %v1274
      %v1468 = vpop.f32.mrf.mxu0
      %v1469 = vadd.f32 %v1308, %v1468
      %1470 = vmatmul.f32.gmra.mxu0 %v1275
      %v1471 = vpop.f32.mrf.mxu0
      %v1472 = vadd.f32 %v1308, %v1471
      %1473 = vmatmul.f32.gmra.mxu0 %v1276
      %v1474 = vpop.f32.mrf.mxu0
      %v1475 = vadd.f32 %v1308, %v1474
      %1476 = vmatmul.f32.gmra.mxu0 %v1277
      %v1477 = vpop.f32.mrf.mxu0
      %v1478 = vadd.f32 %v1308, %v1477
      %1479 = vmatmul.f32.gmra.mxu0 %v1278
      %v1480 = vpop.f32.mrf.mxu0
      %v1481 = vadd.f32 %v1308, %v1480
      %1482 = vmatmul.f32.gmra.mxu0 %v1279
      %v1483 = vpop.f32.mrf.mxu0
      %v1484 = vadd.f32 %v1308, %v1483
      %1485 = vmatmul.f32.gmra.mxu0 %v1280
      %v1486 = vpop.f32.mrf.mxu0
      %v1487 = vadd.f32 %v1308, %v1486
      %1488 = vmatmul.f32.gmra.mxu0 %v1281
      %v1489 = vpop.f32.mrf.mxu0
      %v1490 = vadd.f32 %v1308, %v1489
      %1491 = vmatmul.f32.gmra.mxu0 %v1282
      %v1492 = vpop.f32.mrf.mxu0
      %v1493 = vadd.f32 %v1308, %v1492
      %1494 = vmatmul.f32.gmra.mxu0 %v1283
      %v1495 = vpop.f32.mrf.mxu0
      %v1496 = vadd.f32 %v1308, %v1495
      %1497 = vmatmul.f32.gmra.mxu0 %v1284
      %v1498 = vpop.f32.mrf.mxu0
      %v1499 = vadd.f32 %v1308, %v1498
      %1500 = vmatmul.f32.gmra.mxu0 %v1285
      %v1501 = vpop.f32.mrf.mxu0
      %v1502 = vadd.f32 %v1308, %v1501
      %1503 = vmatmul.f32.gmra.mxu0 %v1286
      %v1504 = vpop.f32.mrf.mxu0
      %v1505 = vadd.f32 %v1308, %v1504
      %1506 = vmatmul.f32.gmra.mxu0 %v1287
      %v1507 = vpop.f32.mrf.mxu0
      %v1508 = vadd.f32 %v1308, %v1507
      %1509 = vmatmul.f32.gmra.mxu0 %v1288
      %v1510 = vpop.f32.mrf.mxu0
      %v1511 = vadd.f32 %v1308, %v1510
      %1512 = vmatmul.f32.gmra.mxu0 %v1289
      %v1513 = vpop.f32.mrf.mxu0
      %v1514 = vadd.f32 %v1308, %v1513
      %1515 = vdwg.mxu0
      %v1516 = vtanh.pop %v1328
      %v1517 = vtanh.pop %v1331
      %v1518 = vtanh.pop %v1334
      %v1519 = vtanh.pop %v1337
      %v1520 = vtanh.pop %v1340
      %v1521 = vtanh.pop %v1343
      %v1522 = vtanh.pop %v1346
      %v1523 = vtanh.pop %v1349
      %v1524 = vtanh.pop %v1352
      %v1525 = vtanh.pop %v1355
      %v1526 = vtanh.pop %v1358
      %v1527 = vtanh.pop %v1361
      %v1528 = vtanh.pop %v1364
      %v1529 = vtanh.pop %v1367
      %v1530 = vtanh.pop %v1370
      %v1531 = vtanh.pop %v1373
      %v1532 = vtanh.pop %v1376
      %v1533 = vtanh.pop %v1379
      %v1534 = vtanh.pop %v1382
      %v1535 = vtanh.pop %v1385
      %v1536 = vtanh.pop %v1388
      %v1537 = vtanh.pop %v1391
      %v1538 = vtanh.pop %v1394
      %v1539 = vtanh.pop %v1397
      %v1540 = vtanh.pop %v1400
      %v1541 = vtanh.pop %v1403
      %v1542 = vtanh.pop %v1406
      %v1543 = vtanh.pop %v1409
      %v1544 = vtanh.pop %v1412
      %v1545 = vtanh.pop %v1415
      %v1546 = vtanh.pop %v1418
      %v1547 = vtanh.pop %v1421
      %v1548 = vtanh.pop %v1424
      %v1549 = vtanh.pop %v1427
      %v1550 = vtanh.pop %v1430
      %v1551 = vtanh.pop %v1433
      %v1552 = vtanh.pop %v1436
      %v1553 = vtanh.pop %v1439
      %v1554 = vtanh.pop %v1442
      %v1555 = vtanh.pop %v1445
      %v1556 = vtanh.pop %v1448
      %v1557 = vtanh.pop %v1451
      %v1558 = vtanh.pop %v1454
      %v1559 = vtanh.pop %v1457
      %v1560 = vtanh.pop %v1460
      %v1561 = vtanh.pop %v1463
      %v1562 = vtanh.pop %v1466
      %v1563 = vtanh.pop %v1469
      %v1564 = vtanh.pop %v1472
      %v1565 = vtanh.pop %v1475
      %v1566 = vtanh.pop %v1478
      %v1567 = vtanh.pop %v1481
      %v1568 = vtanh.pop %v1484
      %v1569 = vtanh.pop %v1487
      %v1570 = vtanh.pop %v1490
      %v1571 = vtanh.pop %v1493
      %v1572 = vtanh.pop %v1496
      %v1573 = vtanh.pop %v1499
      %v1574 = vtanh.pop %v1502
      %v1575 = vtanh.pop %v1505
      %v1576 = vtanh.pop %v1508
      %v1577 = vtanh.pop %v1511
      %v1578 = vtanh.pop %v1514
      %v1579 = vld [vmem:[%s5] sm:$0xff]
      %v1580 = vld [vmem:[%s5 + $0x8] sm:$0xff]
      %v1581 = vld [vmem:[%s5 + $0x10] sm:$0xff]
      %v1582 = vld [vmem:[%s5 + $0x18] sm:$0xff]
      %v1583 = vld [vmem:[%s5 + $0x20] sm:$0xff]
      %v1584 = vld [vmem:[%s5 + $0x28] sm:$0xff]
      %v1585 = vld [vmem:[%s5 + $0x30] sm:$0xff]
      %v1586 = vld [vmem:[%s5 + $0x38] sm:$0xff]
      %v1587 = vld [vmem:[%s5 + $0x40] sm:$0xff]
      %v1588 = vld [vmem:[%s5 + $0x48] sm:$0xff]
      %v1589 = vld [vmem:[%s5 + $0x50] sm:$0xff]
      %v1590 = vld [vmem:[%s5 + $0x58] sm:$0xff]
      %v1591 = vld [vmem:[%s5 + $0x60] sm:$0xff]
      %v1592 = vld [vmem:[%s5 + $0x68] sm:$0xff]
      %v1593 = vld [vmem:[%s5 + $0x70] sm:$0xff]
      %v1594 = vld [vmem:[%s5 + $0x78] sm:$0xff]
      %v1595 = vld [vmem:[%s6] sm:$0x1]
      %v1597 = vperm.slane %v1595, 0
      %1599 = vmatpush.msra.mxu0 %v1594
      %1600 = vmatpush.msra.mxu0 %v1593
      %1601 = vmatpush.msra.mxu0 %v1592
      %1602 = vmatpush.msra.mxu0 %v1591
      %1603 = vmatpush.msra.mxu0 %v1590
      %1604 = vmatpush.msra.mxu0 %v1589
      %1605 = vmatpush.msra.mxu0 %v1588
      %1606 = vmatpush.msra.mxu0 %v1587
      %1607 = vmatpush.msra.mxu0 %v1586
      %1608 = vmatpush.msra.mxu0 %v1585
      %1609 = vmatpush.msra.mxu0 %v1584
      %1610 = vmatpush.msra.mxu0 %v1583
      %1611 = vmatpush.msra.mxu0 %v1582
      %1612 = vmatpush.msra.mxu0 %v1581
      %1613 = vmatpush.msra.mxu0 %v1580
      %1614 = vmatpush.msra.mxu0 %v1579
      %1615 = vmatmul.f32.gmra.mxu0 %v1516
      %v1616 = vpop.f32.mrf.mxu0
      %v1617 = vadd.f32 %v1597, %v1616
      %1618 = vmatmul.f32.gmra.mxu0 %v1517
      %v1619 = vpop.f32.mrf.mxu0
      %v1620 = vadd.f32 %v1597, %v1619
      %1621 = vmatmul.f32.gmra.mxu0 %v1518
      %v1622 = vpop.f32.mrf.mxu0
      %v1623 = vadd.f32 %v1597, %v1622
      %1624 = vmatmul.f32.gmra.mxu0 %v1519
      %v1625 = vpop.f32.mrf.mxu0
      %v1626 = vadd.f32 %v1597, %v1625
      %1627 = vmatmul.f32.gmra.mxu0 %v1520
      %v1628 = vpop.f32.mrf.mxu0
      %v1629 = vadd.f32 %v1597, %v1628
      %1630 = vmatmul.f32.gmra.mxu0 %v1521
      %v1631 = vpop.f32.mrf.mxu0
      %v1632 = vadd.f32 %v1597, %v1631
      %1633 = vmatmul.f32.gmra.mxu0 %v1522
      %v1634 = vpop.f32.mrf.mxu0
      %v1635 = vadd.f32 %v1597, %v1634
      %1636 = vmatmul.f32.gmra.mxu0 %v1523
      %v1637 = vpop.f32.mrf.mxu0
      %v1638 = vadd.f32 %v1597, %v1637
      %1639 = vmatmul.f32.gmra.mxu0 %v1524
      %v1640 = vpop.f32.mrf.mxu0
      %v1641 = vadd.f32 %v1597, %v1640
      %1642 = vmatmul.f32.gmra.mxu0 %v1525
      %v1643 = vpop.f32.mrf.mxu0
      %v1644 = vadd.f32 %v1597, %v1643
      %1645 = vmatmul.f32.gmra.mxu0 %v1526
      %v1646 = vpop.f32.mrf.mxu0
      %v1647 = vadd.f32 %v1597, %v1646
      %1648 = vmatmul.f32.gmra.mxu0 %v1527
      %v1649 = vpop.f32.mrf.mxu0
      %v1650 = vadd.f32 %v1597, %v1649
      %1651 = vmatmul.f32.gmra.mxu0 %v1528
      %v1652 = vpop.f32.mrf.mxu0
      %v1653 = vadd.f32 %v1597, %v1652
      %1654 = vmatmul.f32.gmra.mxu0 %v1529
      %v1655 = vpop.f32.mrf.mxu0
      %v1656 = vadd.f32 %v1597, %v1655
      %1657 = vmatmul.f32.gmra.mxu0 %v1530
      %v1658 = vpop.f32.mrf.mxu0
      %v1659 = vadd.f32 %v1597, %v1658
      %1660 = vmatmul.f32.gmra.mxu0 %v1531
      %v1661 = vpop.f32.mrf.mxu0
      %v1662 = vadd.f32 %v1597, %v1661
      %1663 = vmatmul.f32.gmra.mxu0 %v1532
      %v1664 = vpop.f32.mrf.mxu0
      %v1665 = vadd.f32 %v1597, %v1664
      %1666 = vmatmul.f32.gmra.mxu0 %v1533
      %v1667 = vpop.f32.mrf.mxu0
      %v1668 = vadd.f32 %v1597, %v1667
      %1669 = vmatmul.f32.gmra.mxu0 %v1534
      %v1670 = vpop.f32.mrf.mxu0
      %v1671 = vadd.f32 %v1597, %v1670
      %1672 = vmatmul.f32.gmra.mxu0 %v1535
      %v1673 = vpop.f32.mrf.mxu0
      %v1674 = vadd.f32 %v1597, %v1673
      %1675 = vmatmul.f32.gmra.mxu0 %v1536
      %v1676 = vpop.f32.mrf.mxu0
      %v1677 = vadd.f32 %v1597, %v1676
      %1678 = vmatmul.f32.gmra.mxu0 %v1537
      %v1679 = vpop.f32.mrf.mxu0
      %v1680 = vadd.f32 %v1597, %v1679
      %1681 = vmatmul.f32.gmra.mxu0 %v1538
      %v1682 = vpop.f32.mrf.mxu0
      %v1683 = vadd.f32 %v1597, %v1682
      %1684 = vmatmul.f32.gmra.mxu0 %v1539
      %v1685 = vpop.f32.mrf.mxu0
      %v1686 = vadd.f32 %v1597, %v1685
      %1687 = vmatmul.f32.gmra.mxu0 %v1540
      %v1688 = vpop.f32.mrf.mxu0
      %v1689 = vadd.f32 %v1597, %v1688
      %1690 = vmatmul.f32.gmra.mxu0 %v1541
      %v1691 = vpop.f32.mrf.mxu0
      %v1692 = vadd.f32 %v1597, %v1691
      %1693 = vmatmul.f32.gmra.mxu0 %v1542
      %v1694 = vpop.f32.mrf.mxu0
      %v1695 = vadd.f32 %v1597, %v1694
      %1696 = vmatmul.f32.gmra.mxu0 %v1543
      %v1697 = vpop.f32.mrf.mxu0
      %v1698 = vadd.f32 %v1597, %v1697
      %1699 = vmatmul.f32.gmra.mxu0 %v1544
      %v1700 = vpop.f32.mrf.mxu0
      %v1701 = vadd.f32 %v1597, %v1700
      %1702 = vmatmul.f32.gmra.mxu0 %v1545
      %v1703 = vpop.f32.mrf.mxu0
      %v1704 = vadd.f32 %v1597, %v1703
      %1705 = vmatmul.f32.gmra.mxu0 %v1546
      %v1706 = vpop.f32.mrf.mxu0
      %v1707 = vadd.f32 %v1597, %v1706
      %1708 = vmatmul.f32.gmra.mxu0 %v1547
      %v1709 = vpop.f32.mrf.mxu0
      %v1710 = vadd.f32 %v1597, %v1709
      %1711 = vmatmul.f32.gmra.mxu0 %v1548
      %v1712 = vpop.f32.mrf.mxu0
      %v1713 = vadd.f32 %v1597, %v1712
      %1714 = vmatmul.f32.gmra.mxu0 %v1549
      %v1715 = vpop.f32.mrf.mxu0
      %v1716 = vadd.f32 %v1597, %v1715
      %1717 = vmatmul.f32.gmra.mxu0 %v1550
      %v1718 = vpop.f32.mrf.mxu0
      %v1719 = vadd.f32 %v1597, %v1718
      %1720 = vmatmul.f32.gmra.mxu0 %v1551
      %v1721 = vpop.f32.mrf.mxu0
      %v1722 = vadd.f32 %v1597, %v1721
      %1723 = vmatmul.f32.gmra.mxu0 %v1552
      %v1724 = vpop.f32.mrf.mxu0
      %v1725 = vadd.f32 %v1597, %v1724
      %1726 = vmatmul.f32.gmra.mxu0 %v1553
      %v1727 = vpop.f32.mrf.mxu0
      %v1728 = vadd.f32 %v1597, %v1727
      %1729 = vmatmul.f32.gmra.mxu0 %v1554
      %v1730 = vpop.f32.mrf.mxu0
      %v1731 = vadd.f32 %v1597, %v1730
      %1732 = vmatmul.f32.gmra.mxu0 %v1555
      %v1733 = vpop.f32.mrf.mxu0
      %v1734 = vadd.f32 %v1597, %v1733
      %1735 = vmatmul.f32.gmra.mxu0 %v1556
      %v1736 = vpop.f32.mrf.mxu0
      %v1737 = vadd.f32 %v1597, %v1736
      %1738 = vmatmul.f32.gmra.mxu0 %v1557
      %v1739 = vpop.f32.mrf.mxu0
      %v1740 = vadd.f32 %v1597, %v1739
      %1741 = vmatmul.f32.gmra.mxu0 %v1558
      %v1742 = vpop.f32.mrf.mxu0
      %v1743 = vadd.f32 %v1597, %v1742
      %1744 = vmatmul.f32.gmra.mxu0 %v1559
      %v1745 = vpop.f32.mrf.mxu0
      %v1746 = vadd.f32 %v1597, %v1745
      %1747 = vmatmul.f32.gmra.mxu0 %v1560
      %v1748 = vpop.f32.mrf.mxu0
      %v1749 = vadd.f32 %v1597, %v1748
      %1750 = vmatmul.f32.gmra.mxu0 %v1561
      %v1751 = vpop.f32.mrf.mxu0
      %v1752 = vadd.f32 %v1597, %v1751
      %1753 = vmatmul.f32.gmra.mxu0 %v1562
      %v1754 = vpop.f32.mrf.mxu0
      %v1755 = vadd.f32 %v1597, %v1754
      %1756 = vmatmul.f32.gmra.mxu0 %v1563
      %v1757 = vpop.f32.mrf.mxu0
      %v1758 = vadd.f32 %v1597, %v1757
      %1759 = vmatmul.f32.gmra.mxu0 %v1564
      %v1760 = vpop.f32.mrf.mxu0
      %v1761 = vadd.f32 %v1597, %v1760
      %1762 = vmatmul.f32.gmra.mxu0 %v1565
      %v1763 = vpop.f32.mrf.mxu0
      %v1764 = vadd.f32 %v1597, %v1763
      %1765 = vmatmul.f32.gmra.mxu0 %v1566
      %v1766 = vpop.f32.mrf.mxu0
      %v1767 = vadd.f32 %v1597, %v1766
      %1768 = vmatmul.f32.gmra.mxu0 %v1567
      %v1769 = vpop.f32.mrf.mxu0
      %v1770 = vadd.f32 %v1597, %v1769
      %1771 = vmatmul.f32.gmra.mxu0 %v1568
      %v1772 = vpop.f32.mrf.mxu0
      %v1773 = vadd.f32 %v1597, %v1772
      %1774 = vmatmul.f32.gmra.mxu0 %v1569
      %v1775 = vpop.f32.mrf.mxu0
      %v1776 = vadd.f32 %v1597, %v1775
      %1777 = vmatmul.f32.gmra.mxu0 %v1570
      %v1778 = vpop.f32.mrf.mxu0
      %v1779 = vadd.f32 %v1597, %v1778
      %1780 = vmatmul.f32.gmra.mxu0 %v1571
      %v1781 = vpop.f32.mrf.mxu0
      %v1782 = vadd.f32 %v1597, %v1781
      %1783 = vmatmul.f32.gmra.mxu0 %v1572
      %v1784 = vpop.f32.mrf.mxu0
      %v1785 = vadd.f32 %v1597, %v1784
      %1786 = vmatmul.f32.gmra.mxu0 %v1573
      %v1787 = vpop.f32.mrf.mxu0
      %v1788 = vadd.f32 %v1597, %v1787
      %1789 = vmatmul.f32.gmra.mxu0 %v1574
      %v1790 = vpop.f32.mrf.mxu0
      %v1791 = vadd.f32 %v1597, %v1790
      %1792 = vmatmul.f32.gmra.mxu0 %v1575
      %v1793 = vpop.f32.mrf.mxu0
      %v1794 = vadd.f32 %v1597, %v1793
      %1795 = vmatmul.f32.gmra.mxu0 %v1576
      %v1796 = vpop.f32.mrf.mxu0
      %v1797 = vadd.f32 %v1597, %v1796
      %1798 = vmatmul.f32.gmra.mxu0 %v1577
      %v1799 = vpop.f32.mrf.mxu0
      %v1800 = vadd.f32 %v1597, %v1799
      %1801 = vmatmul.f32.gmra.mxu0 %v1578
      %v1802 = vpop.f32.mrf.mxu0
      %v1803 = vadd.f32 %v1597, %v1802
      %1804 = vdwg.mxu0
      %v1805 = vtanh.pop %v1617
      %v1806 = vtanh.pop %v1620
      %v1807 = vtanh.pop %v1623
      %v1808 = vtanh.pop %v1626
      %v1809 = vtanh.pop %v1629
      %v1810 = vtanh.pop %v1632
      %v1811 = vtanh.pop %v1635
      %v1812 = vtanh.pop %v1638
      %v1813 = vtanh.pop %v1641
      %v1814 = vtanh.pop %v1644
      %v1815 = vtanh.pop %v1647
      %v1816 = vtanh.pop %v1650
      %v1817 = vtanh.pop %v1653
      %v1818 = vtanh.pop %v1656
      %v1819 = vtanh.pop %v1659
      %v1820 = vtanh.pop %v1662
      %v1821 = vtanh.pop %v1665
      %v1822 = vtanh.pop %v1668
      %v1823 = vtanh.pop %v1671
      %v1824 = vtanh.pop %v1674
      %v1825 = vtanh.pop %v1677
      %v1826 = vtanh.pop %v1680
      %v1827 = vtanh.pop %v1683
      %v1828 = vtanh.pop %v1686
      %v1829 = vtanh.pop %v1689
      %v1830 = vtanh.pop %v1692
      %v1831 = vtanh.pop %v1695
      %v1832 = vtanh.pop %v1698
      %v1833 = vtanh.pop %v1701
      %v1834 = vtanh.pop %v1704
      %v1835 = vtanh.pop %v1707
      %v1836 = vtanh.pop %v1710
      %v1837 = vtanh.pop %v1713
      %v1838 = vtanh.pop %v1716
      %v1839 = vtanh.pop %v1719
      %v1840 = vtanh.pop %v1722
      %v1841 = vtanh.pop %v1725
      %v1842 = vtanh.pop %v1728
      %v1843 = vtanh.pop %v1731
      %v1844 = vtanh.pop %v1734
      %v1845 = vtanh.pop %v1737
      %v1846 = vtanh.pop %v1740
      %v1847 = vtanh.pop %v1743
      %v1848 = vtanh.pop %v1746
      %v1849 = vtanh.pop %v1749
      %v1850 = vtanh.pop %v1752
      %v1851 = vtanh.pop %v1755
      %v1852 = vtanh.pop %v1758
      %v1853 = vtanh.pop %v1761
      %v1854 = vtanh.pop %v1764
      %v1855 = vtanh.pop %v1767
      %v1856 = vtanh.pop %v1770
      %v1857 = vtanh.pop %v1773
      %v1858 = vtanh.pop %v1776
      %v1859 = vtanh.pop %v1779
      %v1860 = vtanh.pop %v1782
      %v1861 = vtanh.pop %v1785
      %v1862 = vtanh.pop %v1788
      %v1863 = vtanh.pop %v1791
      %v1864 = vtanh.pop %v1794
      %v1865 = vtanh.pop %v1797
      %v1866 = vtanh.pop %v1800
      %v1867 = vtanh.pop %v1803
      %v1868 = vld [vmem:[%s7] sm:$0x1]
      %v1870 = vperm.slane %v1868, 0
      %v1872 = vmul.f32 %v1805, %v1870
      %v1873 = vmul.f32 %v1806, %v1870
      %v1874 = vmul.f32 %v1807, %v1870
      %v1875 = vmul.f32 %v1808, %v1870
      %v1876 = vmul.f32 %v1809, %v1870
      %v1877 = vmul.f32 %v1810, %v1870
      %v1878 = vmul.f32 %v1811, %v1870
      %v1879 = vmul.f32 %v1812, %v1870
      %v1880 = vmul.f32 %v1813, %v1870
      %v1881 = vmul.f32 %v1814, %v1870
      %v1882 = vmul.f32 %v1815, %v1870
      %v1883 = vmul.f32 %v1816, %v1870
      %v1884 = vmul.f32 %v1817, %v1870
      %v1885 = vmul.f32 %v1818, %v1870
      %v1886 = vmul.f32 %v1819, %v1870
      %v1887 = vmul.f32 %v1820, %v1870
      %v1888 = vmul.f32 %v1821, %v1870
      %v1889 = vmul.f32 %v1822, %v1870
      %v1890 = vmul.f32 %v1823, %v1870
      %v1891 = vmul.f32 %v1824, %v1870
      %v1892 = vmul.f32 %v1825, %v1870
      %v1893 = vmul.f32 %v1826, %v1870
      %v1894 = vmul.f32 %v1827, %v1870
      %v1895 = vmul.f32 %v1828, %v1870
      %v1896 = vmul.f32 %v1829, %v1870
      %v1897 = vmul.f32 %v1830, %v1870
      %v1898 = vmul.f32 %v1831, %v1870
      %v1899 = vmul.f32 %v1832, %v1870
      %v1900 = vmul.f32 %v1833, %v1870
      %v1901 = vmul.f32 %v1834, %v1870
      %v1902 = vmul.f32 %v1835, %v1870
      %v1903 = vmul.f32 %v1836, %v1870
      %v1904 = vmul.f32 %v1837, %v1870
      %v1905 = vmul.f32 %v1838, %v1870
      %v1906 = vmul.f32 %v1839, %v1870
      %v1907 = vmul.f32 %v1840, %v1870
      %v1908 = vmul.f32 %v1841, %v1870
      %v1909 = vmul.f32 %v1842, %v1870
      %v1910 = vmul.f32 %v1843, %v1870
      %v1911 = vmul.f32 %v1844, %v1870
      %v1912 = vmul.f32 %v1845, %v1870
      %v1913 = vmul.f32 %v1846, %v1870
      %v1914 = vmul.f32 %v1847, %v1870
      %v1915 = vmul.f32 %v1848, %v1870
      %v1916 = vmul.f32 %v1849, %v1870
      %v1917 = vmul.f32 %v1850, %v1870
      %v1918 = vmul.f32 %v1851, %v1870
      %v1919 = vmul.f32 %v1852, %v1870
      %v1920 = vmul.f32 %v1853, %v1870
      %v1921 = vmul.f32 %v1854, %v1870
      %v1922 = vmul.f32 %v1855, %v1870
      %v1923 = vmul.f32 %v1856, %v1870
      %v1924 = vmul.f32 %v1857, %v1870
      %v1925 = vmul.f32 %v1858, %v1870
      %v1926 = vmul.f32 %v1859, %v1870
      %v1927 = vmul.f32 %v1860, %v1870
      %v1928 = vmul.f32 %v1861, %v1870
      %v1929 = vmul.f32 %v1862, %v1870
      %v1930 = vmul.f32 %v1863, %v1870
      %v1931 = vmul.f32 %v1864, %v1870
      %v1932 = vmul.f32 %v1865, %v1870
      %v1933 = vmul.f32 %v1866, %v1870
      %v1934 = vmul.f32 %v1867, %v1870
      %1935 = vadd.xlane.f32.xlu0 %v1872
      %v1936 = vpop.xlane.xlu0 %1935
      %1937 = vadd.xlane.f32.xlu0 %v1873
      %v1938 = vpop.xlane.xlu0 %1937
      %1939 = vadd.xlane.f32.xlu0 %v1874
      %v1940 = vpop.xlane.xlu0 %1939
      %1941 = vadd.xlane.f32.xlu0 %v1875
      %v1942 = vpop.xlane.xlu0 %1941
      %1943 = vadd.xlane.f32.xlu0 %v1876
      %v1944 = vpop.xlane.xlu0 %1943
      %1945 = vadd.xlane.f32.xlu0 %v1877
      %v1946 = vpop.xlane.xlu0 %1945
      %1947 = vadd.xlane.f32.xlu0 %v1878
      %v1948 = vpop.xlane.xlu0 %1947
      %1949 = vadd.xlane.f32.xlu0 %v1879
      %v1950 = vpop.xlane.xlu0 %1949
      %1951 = vadd.xlane.f32.xlu0 %v1880
      %v1952 = vpop.xlane.xlu0 %1951
      %1953 = vadd.xlane.f32.xlu0 %v1881
      %v1954 = vpop.xlane.xlu0 %1953
      %1955 = vadd.xlane.f32.xlu0 %v1882
      %v1956 = vpop.xlane.xlu0 %1955
      %1957 = vadd.xlane.f32.xlu0 %v1883
      %v1958 = vpop.xlane.xlu0 %1957
      %1959 = vadd.xlane.f32.xlu0 %v1884
      %v1960 = vpop.xlane.xlu0 %1959
      %1961 = vadd.xlane.f32.xlu0 %v1885
      %v1962 = vpop.xlane.xlu0 %1961
      %1963 = vadd.xlane.f32.xlu0 %v1886
      %v1964 = vpop.xlane.xlu0 %1963
      %1965 = vadd.xlane.f32.xlu0 %v1887
      %v1966 = vpop.xlane.xlu0 %1965
      %1967 = vadd.xlane.f32.xlu0 %v1888
      %v1968 = vpop.xlane.xlu0 %1967
      %1969 = vadd.xlane.f32.xlu0 %v1889
      %v1970 = vpop.xlane.xlu0 %1969
      %1971 = vadd.xlane.f32.xlu0 %v1890
      %v1972 = vpop.xlane.xlu0 %1971
      %1973 = vadd.xlane.f32.xlu0 %v1891
      %v1974 = vpop.xlane.xlu0 %1973
      %1975 = vadd.xlane.f32.xlu0 %v1892
      %v1976 = vpop.xlane.xlu0 %1975
      %1977 = vadd.xlane.f32.xlu0 %v1893
      %v1978 = vpop.xlane.xlu0 %1977
      %1979 = vadd.xlane.f32.xlu0 %v1894
      %v1980 = vpop.xlane.xlu0 %1979
      %1981 = vadd.xlane.f32.xlu0 %v1895
      %v1982 = vpop.xlane.xlu0 %1981
      %1983 = vadd.xlane.f32.xlu0 %v1896
      %v1984 = vpop.xlane.xlu0 %1983
      %1985 = vadd.xlane.f32.xlu0 %v1897
      %v1986 = vpop.xlane.xlu0 %1985
      %1987 = vadd.xlane.f32.xlu0 %v1898
      %v1988 = vpop.xlane.xlu0 %1987
      %1989 = vadd.xlane.f32.xlu0 %v1899
      %v1990 = vpop.xlane.xlu0 %1989
      %1991 = vadd.xlane.f32.xlu0 %v1900
      %v1992 = vpop.xlane.xlu0 %1991
      %1993 = vadd.xlane.f32.xlu0 %v1901
      %v1994 = vpop.xlane.xlu0 %1993
      %1995 = vadd.xlane.f32.xlu0 %v1902
      %v1996 = vpop.xlane.xlu0 %1995
      %1997 = vadd.xlane.f32.xlu0 %v1903
      %v1998 = vpop.xlane.xlu0 %1997
      %1999 = vadd.xlane.f32.xlu0 %v1904
      %v2000 = vpop.xlane.xlu0 %1999
      %2001 = vadd.xlane.f32.xlu0 %v1905
      %v2002 = vpop.xlane.xlu0 %2001
      %2003 = vadd.xlane.f32.xlu0 %v1906
      %v2004 = vpop.xlane.xlu0 %2003
      %2005 = vadd.xlane.f32.xlu0 %v1907
      %v2006 = vpop.xlane.xlu0 %2005
      %2007 = vadd.xlane.f32.xlu0 %v1908
      %v2008 = vpop.xlane.xlu0 %2007
      %2009 = vadd.xlane.f32.xlu0 %v1909
      %v2010 = vpop.xlane.xlu0 %2009
      %2011 = vadd.xlane.f32.xlu0 %v1910
      %v2012 = vpop.xlane.xlu0 %2011
      %2013 = vadd.xlane.f32.xlu0 %v1911
      %v2014 = vpop.xlane.xlu0 %2013
      %2015 = vadd.xlane.f32.xlu0 %v1912
      %v2016 = vpop.xlane.xlu0 %2015
      %2017 = vadd.xlane.f32.xlu0 %v1913
      %v2018 = vpop.xlane.xlu0 %2017
      %2019 = vadd.xlane.f32.xlu0 %v1914
      %v2020 = vpop.xlane.xlu0 %2019
      %2021 = vadd.xlane.f32.xlu0 %v1915
      %v2022 = vpop.xlane.xlu0 %2021
      %2023 = vadd.xlane.f32.xlu0 %v1916
      %v2024 = vpop.xlane.xlu0 %2023
      %2025 = vadd.xlane.f32.xlu0 %v1917
      %v2026 = vpop.xlane.xlu0 %2025
      %2027 = vadd.xlane.f32.xlu0 %v1918
      %v2028 = vpop.xlane.xlu0 %2027
      %2029 = vadd.xlane.f32.xlu0 %v1919
      %v2030 = vpop.xlane.xlu0 %2029
      %2031 = vadd.xlane.f32.xlu0 %v1920
      %v2032 = vpop.xlane.xlu0 %2031
      %2033 = vadd.xlane.f32.xlu0 %v1921
      %v2034 = vpop.xlane.xlu0 %2033
      %2035 = vadd.xlane.f32.xlu0 %v1922
      %v2036 = vpop.xlane.xlu0 %2035
      %2037 = vadd.xlane.f32.xlu0 %v1923
      %v2038 = vpop.xlane.xlu0 %2037
      %2039 = vadd.xlane.f32.xlu0 %v1924
      %v2040 = vpop.xlane.xlu0 %2039
      %2041 = vadd.xlane.f32.xlu0 %v1925
      %v2042 = vpop.xlane.xlu0 %2041
      %2043 = vadd.xlane.f32.xlu0 %v1926
      %v2044 = vpop.xlane.xlu0 %2043
      %2045 = vadd.xlane.f32.xlu0 %v1927
      %v2046 = vpop.xlane.xlu0 %2045
      %2047 = vadd.xlane.f32.xlu0 %v1928
      %v2048 = vpop.xlane.xlu0 %2047
      %2049 = vadd.xlane.f32.xlu0 %v1929
      %v2050 = vpop.xlane.xlu0 %2049
      %2051 = vadd.xlane.f32.xlu0 %v1930
      %v2052 = vpop.xlane.xlu0 %2051
      %2053 = vadd.xlane.f32.xlu0 %v1931
      %v2054 = vpop.xlane.xlu0 %2053
      %2055 = vadd.xlane.f32.xlu0 %v1932
      %v2056 = vpop.xlane.xlu0 %2055
      %2057 = vadd.xlane.f32.xlu0 %v1933
      %v2058 = vpop.xlane.xlu0 %2057
      %2059 = vadd.xlane.f32.xlu0 %v1934
      %v2060 = vpop.xlane.xlu0 %2059
      %v2061 = vld [vmem:[#allocation2] sm:$0x1]
      %v2063 = vperm.slane %v2061, 0
      %v2065 = vadd.f32 %v1936, %v2063
      %v2066 = vadd.f32 %v1938, %v2063
      %v2067 = vadd.f32 %v1940, %v2063
      %v2068 = vadd.f32 %v1942, %v2063
      %v2069 = vadd.f32 %v1944, %v2063
      %v2070 = vadd.f32 %v1946, %v2063
      %v2071 = vadd.f32 %v1948, %v2063
      %v2072 = vadd.f32 %v1950, %v2063
      %v2073 = vadd.f32 %v1952, %v2063
      %v2074 = vadd.f32 %v1954, %v2063
      %v2075 = vadd.f32 %v1956, %v2063
      %v2076 = vadd.f32 %v1958, %v2063
      %v2077 = vadd.f32 %v1960, %v2063
      %v2078 = vadd.f32 %v1962, %v2063
      %v2079 = vadd.f32 %v1964, %v2063
      %v2080 = vadd.f32 %v1966, %v2063
      %v2081 = vadd.f32 %v1968, %v2063
      %v2082 = vadd.f32 %v1970, %v2063
      %v2083 = vadd.f32 %v1972, %v2063
      %v2084 = vadd.f32 %v1974, %v2063
      %v2085 = vadd.f32 %v1976, %v2063
      %v2086 = vadd.f32 %v1978, %v2063
      %v2087 = vadd.f32 %v1980, %v2063
      %v2088 = vadd.f32 %v1982, %v2063
      %v2089 = vadd.f32 %v1984, %v2063
      %v2090 = vadd.f32 %v1986, %v2063
      %v2091 = vadd.f32 %v1988, %v2063
      %v2092 = vadd.f32 %v1990, %v2063
      %v2093 = vadd.f32 %v1992, %v2063
      %v2094 = vadd.f32 %v1994, %v2063
      %v2095 = vadd.f32 %v1996, %v2063
      %v2096 = vadd.f32 %v1998, %v2063
      %v2097 = vadd.f32 %v2000, %v2063
      %v2098 = vadd.f32 %v2002, %v2063
      %v2099 = vadd.f32 %v2004, %v2063
      %v2100 = vadd.f32 %v2006, %v2063
      %v2101 = vadd.f32 %v2008, %v2063
      %v2102 = vadd.f32 %v2010, %v2063
      %v2103 = vadd.f32 %v2012, %v2063
      %v2104 = vadd.f32 %v2014, %v2063
      %v2105 = vadd.f32 %v2016, %v2063
      %v2106 = vadd.f32 %v2018, %v2063
      %v2107 = vadd.f32 %v2020, %v2063
      %v2108 = vadd.f32 %v2022, %v2063
      %v2109 = vadd.f32 %v2024, %v2063
      %v2110 = vadd.f32 %v2026, %v2063
      %v2111 = vadd.f32 %v2028, %v2063
      %v2112 = vadd.f32 %v2030, %v2063
      %v2113 = vadd.f32 %v2032, %v2063
      %v2114 = vadd.f32 %v2034, %v2063
      %v2115 = vadd.f32 %v2036, %v2063
      %v2116 = vadd.f32 %v2038, %v2063
      %v2117 = vadd.f32 %v2040, %v2063
      %v2118 = vadd.f32 %v2042, %v2063
      %v2119 = vadd.f32 %v2044, %v2063
      %v2120 = vadd.f32 %v2046, %v2063
      %v2121 = vadd.f32 %v2048, %v2063
      %v2122 = vadd.f32 %v2050, %v2063
      %v2123 = vadd.f32 %v2052, %v2063
      %v2124 = vadd.f32 %v2054, %v2063
      %v2125 = vadd.f32 %v2056, %v2063
      %v2126 = vadd.f32 %v2058, %v2063
      %v2127 = vadd.f32 %v2060, %v2063
      %vm2128 = vcmask 7168
      %2129 = vst.msk [vmem:[%s336] sm:$0xff] %vm2128, %v2065
      %2130 = vst.msk [vmem:[%s336 + $0x8] sm:$0xff] %vm2128, %v2066
      %2131 = vst.msk [vmem:[%s336 + $0x10] sm:$0xff] %vm2128, %v2067
      %2132 = vst.msk [vmem:[%s336 + $0x18] sm:$0xff] %vm2128, %v2068
      %2133 = vst.msk [vmem:[%s336 + $0x20] sm:$0xff] %vm2128, %v2069
      %2134 = vst.msk [vmem:[%s336 + $0x28] sm:$0xff] %vm2128, %v2070
      %2135 = vst.msk [vmem:[%s336 + $0x30] sm:$0xff] %vm2128, %v2071
      %2136 = vst.msk [vmem:[%s336 + $0x38] sm:$0xff] %vm2128, %v2072
      %2137 = vst.msk [vmem:[%s336 + $0x40] sm:$0xff] %vm2128, %v2073
      %2138 = vst.msk [vmem:[%s336 + $0x48] sm:$0xff] %vm2128, %v2074
      %2139 = vst.msk [vmem:[%s336 + $0x50] sm:$0xff] %vm2128, %v2075
      %2140 = vst.msk [vmem:[%s336 + $0x58] sm:$0xff] %vm2128, %v2076
      %2141 = vst.msk [vmem:[%s336 + $0x60] sm:$0xff] %vm2128, %v2077
      %2142 = vst.msk [vmem:[%s336 + $0x68] sm:$0xff] %vm2128, %v2078
      %2143 = vst.msk [vmem:[%s336 + $0x70] sm:$0xff] %vm2128, %v2079
      %2144 = vst.msk [vmem:[%s336 + $0x78] sm:$0xff] %vm2128, %v2080
      %2145 = vst.msk [vmem:[%s336 + $0x80] sm:$0xff] %vm2128, %v2081
      %2146 = vst.msk [vmem:[%s336 + $0x88] sm:$0xff] %vm2128, %v2082
      %2147 = vst.msk [vmem:[%s336 + $0x90] sm:$0xff] %vm2128, %v2083
      %2148 = vst.msk [vmem:[%s336 + $0x98] sm:$0xff] %vm2128, %v2084
      %2149 = vst.msk [vmem:[%s336 + $0xa0] sm:$0xff] %vm2128, %v2085
      %2150 = vst.msk [vmem:[%s336 + $0xa8] sm:$0xff] %vm2128, %v2086
      %2151 = vst.msk [vmem:[%s336 + $0xb0] sm:$0xff] %vm2128, %v2087
      %2152 = vst.msk [vmem:[%s336 + $0xb8] sm:$0xff] %vm2128, %v2088
      %2153 = vst.msk [vmem:[%s336 + $0xc0] sm:$0xff] %vm2128, %v2089
      %2154 = vst.msk [vmem:[%s336 + $0xc8] sm:$0xff] %vm2128, %v2090
      %2155 = vst.msk [vmem:[%s336 + $0xd0] sm:$0xff] %vm2128, %v2091
      %2156 = vst.msk [vmem:[%s336 + $0xd8] sm:$0xff] %vm2128, %v2092
      %2157 = vst.msk [vmem:[%s336 + $0xe0] sm:$0xff] %vm2128, %v2093
      %2158 = vst.msk [vmem:[%s336 + $0xe8] sm:$0xff] %vm2128, %v2094
      %2159 = vst.msk [vmem:[%s336 + $0xf0] sm:$0xff] %vm2128, %v2095
      %2160 = vst.msk [vmem:[%s336 + $0xf8] sm:$0xff] %vm2128, %v2096
      %2161 = vst.msk [vmem:[%s336 + $0x100] sm:$0xff] %vm2128, %v2097
      %2162 = vst.msk [vmem:[%s336 + $0x108] sm:$0xff] %vm2128, %v2098
      %2163 = vst.msk [vmem:[%s336 + $0x110] sm:$0xff] %vm2128, %v2099
      %2164 = vst.msk [vmem:[%s336 + $0x118] sm:$0xff] %vm2128, %v2100
      %2165 = vst.msk [vmem:[%s336 + $0x120] sm:$0xff] %vm2128, %v2101
      %2166 = vst.msk [vmem:[%s336 + $0x128] sm:$0xff] %vm2128, %v2102
      %2167 = vst.msk [vmem:[%s336 + $0x130] sm:$0xff] %vm2128, %v2103
      %2168 = vst.msk [vmem:[%s336 + $0x138] sm:$0xff] %vm2128, %v2104
      %2169 = vst.msk [vmem:[%s336 + $0x140] sm:$0xff] %vm2128, %v2105
      %2170 = vst.msk [vmem:[%s336 + $0x148] sm:$0xff] %vm2128, %v2106
      %2171 = vst.msk [vmem:[%s336 + $0x150] sm:$0xff] %vm2128, %v2107
      %2172 = vst.msk [vmem:[%s336 + $0x158] sm:$0xff] %vm2128, %v2108
      %2173 = vst.msk [vmem:[%s336 + $0x160] sm:$0xff] %vm2128, %v2109
      %2174 = vst.msk [vmem:[%s336 + $0x168] sm:$0xff] %vm2128, %v2110
      %2175 = vst.msk [vmem:[%s336 + $0x170] sm:$0xff] %vm2128, %v2111
      %2176 = vst.msk [vmem:[%s336 + $0x178] sm:$0xff] %vm2128, %v2112
      %2177 = vst.msk [vmem:[%s336 + $0x180] sm:$0xff] %vm2128, %v2113
      %2178 = vst.msk [vmem:[%s336 + $0x188] sm:$0xff] %vm2128, %v2114
      %2179 = vst.msk [vmem:[%s336 + $0x190] sm:$0xff] %vm2128, %v2115
      %2180 = vst.msk [vmem:[%s336 + $0x198] sm:$0xff] %vm2128, %v2116
      %2181 = vst.msk [vmem:[%s336 + $0x1a0] sm:$0xff] %vm2128, %v2117
      %2182 = vst.msk [vmem:[%s336 + $0x1a8] sm:$0xff] %vm2128, %v2118
      %2183 = vst.msk [vmem:[%s336 + $0x1b0] sm:$0xff] %vm2128, %v2119
      %2184 = vst.msk [vmem:[%s336 + $0x1b8] sm:$0xff] %vm2128, %v2120
      %2185 = vst.msk [vmem:[%s336 + $0x1c0] sm:$0xff] %vm2128, %v2121
      %2186 = vst.msk [vmem:[%s336 + $0x1c8] sm:$0xff] %vm2128, %v2122
      %2187 = vst.msk [vmem:[%s336 + $0x1d0] sm:$0xff] %vm2128, %v2123
      %2188 = vst.msk [vmem:[%s336 + $0x1d8] sm:$0xff] %vm2128, %v2124
      %2189 = vst.msk [vmem:[%s336 + $0x1e0] sm:$0xff] %vm2128, %v2125
      %2190 = vst.msk [vmem:[%s336 + $0x1e8] sm:$0xff] %vm2128, %v2126
      %2191 = vst.msk [vmem:[%s336 + $0x1f0] sm:$0xff] %vm2128, %v2127
      %s2192 = smul.u32 63, %s22
      %p2193 = scmp.lt.s32.totalorder %s2192, 125
      %s2194 = scalar_select %p2193, %s2192, 125
      %s2195 = smul.addr %s2194, 8
      %s2196 = scalar_lea.vmem %s9, %s2195
      // Predicated region
      $region57: #{tpu_custom_call.1} parent=55 // pred_check
        %p2197 = pneg %p234
      $region58: #{tpu_custom_call.1} parent=55 // pred_check_branch
        %2199 = sbr.rel (%p2197) target = $region60
      $region59: #{tpu_custom_call.1} parent=55 // pred_region
        %s2200 = smul.u32 63, %s22
      $region60: #{tpu_custom_call.1} parent=55 // pred_fallthru
        _
    $region56: #{tpu_custom_call.1} parent=5 // pred_fallthru
      _
    %p2201 = scmp.le.s32.totalorder 2, %s17
    // Predicated region
    $region61: #{tpu_custom_call.1} parent=5 // pred_check
      %p2202 = pneg %p2201
    $region62: #{tpu_custom_call.1} parent=5 // pred_check_branch
      %2204 = sbr.rel (%p2202) target = $region64
    $region63: #{tpu_custom_call.1} parent=5 // pred_region
      %s2205 = ssub.s32 %s17, 2
      // Predicated region
      $region65: #{tpu_custom_call.1} parent=63 // pred_check
        %p2206 = pneg %p240
      $region66: #{tpu_custom_call.1} parent=63 // pred_check_branch
        %2208 = sbr.rel (%p2206) target = $region68
      $region67: #{tpu_custom_call.1} parent=63 // pred_region
        %s2209 = smul.u32 63, %s23
        %p2210 = scmp.lt.s32.totalorder %s2209, 125
        %s2211 = scalar_select %p2210, %s2209, 125
        %s2212 = smul.addr %s2211, 8
        %s2213 = scalar_lea.vmem %s9, %s2212
      $region68: #{tpu_custom_call.1} parent=63 // pred_fallthru
        _
    $region64: #{tpu_custom_call.1} parent=5 // pred_fallthru
      _
  $region6: #{tpu_custom_call.1} parent=0 // loop_footer
    %s21 = sadd.s32 1, %s17
  $region7: #{tpu_custom_call.1} parent=0 // loop_footer_branch
    %16 = sbr.rel target = $region3
  $region8: #{tpu_custom_call.1} parent=0 // loop_exit
    _

</llo_original>
